<compile_context>
chip_gen: v6e
topology: v6e:2x2x1
jax: 0.10.0
libtpu: 0.0.40
codegen_flags: <defaults>
</compile_context>

<pallas_src>
import functools

import jax
import jax.numpy as jnp
from jax.experimental import pallas as pl
from jax.experimental.pallas import tpu as pltpu


def _round_up(x, m):
    return ((x + m - 1) // m) * m


# --------------------------------------------------------------------------- kernels


def lstm_stack_kernel(x0_ref, h0_ref, c0_ref, w0_ref, wr_ref, b_ref,
                      h_out_ref, c_out_ref, h_top_ref,
                      xh_scr, hh_scr, gate_scr,
                      *, e_pad, hid_pad, w_dtype):
    """One LSTM layer per grid step (grid axis = layer, 'arbitrary').

    Layer 0 uses the resident fused weight W0 (E_pad+H_pad, 4*H_pad) on [x0 | h0];
    layers > 0 use the streamed per-layer fused weight (2*H_pad, 4*H_pad) on
    [h_{l-1} | h_prev].  Each gate lives in its own lane-aligned H_pad column block.
    Activations are cast to the weight dtype (bf16) at the MXU; gate math stays f32.
    """
    # TODO(synk): for very large H_pad (>=512 f32) on v7x, add a second grid axis over
    # the 4*H_pad gate columns so the double-buffered weight block fits 64 MiB VMEM.
    H = hid_pad
    l = pl.program_id(0)
    h_prev = h0_ref[0]                          # (B_pad, H_pad)
    c_prev = c0_ref[0]                          # (B_pad, H_pad)

    @pl.when(l == 0)
    def _():
        xh_scr[:, :e_pad] = x0_ref[...]
        xh_scr[:, e_pad:] = h_prev
        gate_scr[...] = jnp.dot(xh_scr[...].astype(w_dtype), w0_ref[...],
                                preferred_element_type=jnp.float32)

    @pl.when(l > 0)
    def _():
        # hh_scr[:, :H] already holds the previous layer's h_new (written below).
        hh_scr[:, H:] = h_prev
        gate_scr[...] = jnp.dot(hh_scr[...].astype(w_dtype), wr_ref[0],
                                preferred_element_type=jnp.float32)

    gates = gate_scr[...] + b_ref[0]            # (B_pad, 4*H_pad), f32
    i = jax.nn.sigmoid(gates[:, 0 * H:1 * H])   # lane-aligned slices (H multiple of 128)
    f = jax.nn.sigmoid(gates[:, 1 * H:2 * H])
    g = jnp.tanh(gates[:, 2 * H:3 * H])
    o = jax.nn.sigmoid(gates[:, 3 * H:4 * H])

    c_new = f * c_prev + i * g
    h_new = o * jnp.tanh(c_new)

    h_out_ref[0] = h_new
    c_out_ref[0] = c_new
    hh_scr[:, :H] = h_new                       # next layer's input

    @pl.when(l == pl.num_programs(0) - 1)
    def _():
        h_top_ref[...] = h_new                  # only the last layer writes the top output


def fc_kernel(h_ref, w_ref, b_ref, o_ref, *, w_dtype):
    """One vocab tile of fc_out: (B_pad, H_pad) @ (H_pad, TILE_V) + bias."""
    # TODO(synk): on v7x the (H_pad, V_pad) weight could additionally be fp8-quantized.
    o_ref[...] = (jnp.dot(h_ref[...].astype(w_dtype), w_ref[...],
                          preferred_element_type=jnp.float32) + b_ref[...])


# ----------------------------------------------------------------- one-time packing


def init_params(key, output_dim, emb_dim, hid_dim, n_layers):
    """Deterministic synthetic parameters with PyTorch-equivalent shapes."""
    ks = jax.random.split(key, 2 + 4 * n_layers + 2)
    k = 1.0 / jnp.sqrt(hid_dim)
    p = {"embedding": jax.random.normal(ks[0], (output_dim, emb_dim), jnp.float32)}
    w_ih, w_hh, b_ih, b_hh = [], [], [], []
    for l in range(n_layers):
        in_sz = emb_dim if l == 0 else hid_dim
        base = 2 + 4 * l
        w_ih.append(jax.random.uniform(ks[base + 0], (4 * hid_dim, in_sz), jnp.float32, -k, k))
        w_hh.append(jax.random.uniform(ks[base + 1], (4 * hid_dim, hid_dim), jnp.float32, -k, k))
        b_ih.append(jax.random.uniform(ks[base + 2], (4 * hid_dim,), jnp.float32, -k, k))
        b_hh.append(jax.random.uniform(ks[base + 3], (4 * hid_dim,), jnp.float32, -k, k))
    p["w_ih"], p["w_hh"], p["b_ih"], p["b_hh"] = w_ih, w_hh, b_ih, b_hh
    p["fc_w"] = jax.random.uniform(ks[-2], (output_dim, hid_dim), jnp.float32, -k, k)
    p["fc_b"] = jax.random.uniform(ks[-1], (output_dim,), jnp.float32, -k, k)
    return p


def pack_decoder_params(params, *, weight_dtype=jnp.bfloat16, tile_v=1024):
    """Pack weights ONCE (hoisted out of the per-token decode step).

    * Layer 0 fused [w_ih0; w_hh0] -> (E_pad+H_pad, 4*H_pad); layers 1..L-1 fused
      [w_ih; w_hh] -> (2*H_pad, 4*H_pad): no zero-padded rows are ever streamed.
    * Each gate occupies its own lane-aligned H_pad-wide column block.
    * fc_out packed as (H_pad, V_pad), streamed in TILE_V lane tiles; TILE_V defaults
      large (overhead-bound otherwise) and is clamped to a v7x-safe VMEM budget.
    * Default weight_dtype=bfloat16 (decode is HBM-weight-stream bound); biases and
      state stay f32.
    """
    emb = params["embedding"]
    V, E = emb.shape
    H = params["w_hh"][0].shape[1]
    L = len(params["w_ih"])
    H_pad = _round_up(H, 128)
    E_pad = _round_up(E, 128)
    w_dtype = jnp.dtype(weight_dtype)
    wbytes = w_dtype.itemsize

    # fc vocab tile: big (pipeline-overhead bound at 256), but keep the double-buffered
    # weight tile within ~24 MiB so v7x (64 MiB physical VMEM) can still double-buffer.
    tile_v = max(128, (tile_v // 128) * 128)
    max_tile = max(128, ((24 << 20) // (2 * H_pad * wbytes)) // 128 * 128)
    tile_v = min(tile_v, max_tile, _round_up(V, 128))
    V_pad = _round_up(V, tile_v)

    def gate_expand(w):  # (rows, 4H) -> (rows, 4*H_pad) with lane-aligned gate blocks
        rows = w.shape[0]
        out = jnp.zeros((rows, 4 * H_pad), jnp.float32)
        for g in range(4):
            out = out.at[:, g * H_pad:g * H_pad + H].set(w[:, g * H:(g + 1) * H])
        return out

    # layer 0: fused [w_ih0; w_hh0]
    w0 = jnp.zeros((E_pad + H_pad, 4 * H_pad), jnp.float32)
    w0 = w0.at[:E].set(gate_expand(params["w_ih"][0].T))
    w0 = w0.at[E_pad:E_pad + H].set(gate_expand(params["w_hh"][0].T))

    # layers 1..L-1: fused [w_ih_l; w_hh_l] with no D_pad zero rows
    wr_layers = []
    for l in range(1, L):
        wr = jnp.zeros((2 * H_pad, 4 * H_pad), jnp.float32)
        wr = wr.at[:H].set(gate_expand(params["w_ih"][l].T))
        wr = wr.at[H_pad:H_pad + H].set(gate_expand(params["w_hh"][l].T))
        wr_layers.append(wr)
    if not wr_layers:   # L == 1: dummy block (never used by the kernel)
        wr_layers.append(jnp.zeros((2 * H_pad, 4 * H_pad), jnp.float32))

    b_layers = [gate_expand((params["b_ih"][l] + params["b_hh"][l])[None, :])
                for l in range(L)]

    w_fc = jnp.zeros((H_pad, V_pad), jnp.float32).at[:H, :V].set(params["fc_w"].T)
    b_fc = jnp.zeros((1, V_pad), jnp.float32).at[0, :V].set(params["fc_b"])
    emb_p = jnp.zeros((V, E_pad), jnp.float32).at[:, :E].set(emb)

    return {
        "emb": emb_p,                                  # (V, E_pad)  f32
        "W0": w0.astype(w_dtype),                      # (E_pad+H_pad, 4*H_pad)
        "Wr": jnp.stack(wr_layers).astype(w_dtype),    # (max(L-1,1), 2*H_pad, 4*H_pad)
        "b": jnp.stack(b_layers),                      # (L, 1, 4*H_pad)  f32
        "w_fc": w_fc.astype(w_dtype),                  # (H_pad, V_pad)
        "b_fc": b_fc,                                  # (1, V_pad)  f32
        "w_dtype": w_dtype,
        "dims": dict(V=V, E=E, H=H, L=L, H_pad=H_pad, E_pad=E_pad,
                     V_pad=V_pad, tile_v=tile_v),
    }


# -------------------------------------------------------- persistent padded state


def pad_state(hidden, cell, packed):
    """Pad (L, B, H) state ONCE to the persistent (L, B_pad, H_pad) kernel layout."""
    d = packed["dims"]
    L, B, H = hidden.shape
    B_pad = max(_round_up(B, 8), 8)
    pad = ((0, 0), (0, B_pad - B), (0, d["H_pad"] - H))
    return jnp.pad(hidden, pad), jnp.pad(cell, pad)


def unpad_state(hidden_pad, cell_pad, batch, packed):
    H = packed["dims"]["H"]
    return hidden_pad[:, :batch, :H], cell_pad[:, :batch, :H]


# -------------------------------------------------------------------- decode step


def decoder_step(tokens, hidden_pad, cell_pad, packed):
    """tokens: (B,) int32; hidden_pad/cell_pad: persistent padded (L, B_pad, H_pad).

    Returns (pred (B, V), hidden_pad, cell_pad) with the state kept in padded layout.
    Padded hidden lanes provably stay exactly zero (zero weight columns + zero bias).
    """
    d = packed["dims"]
    V, L = d["V"], d["L"]
    H_pad, E_pad, V_pad, TILE_V = d["H_pad"], d["E_pad"], d["V_pad"], d["tile_v"]
    w_dtype = packed["w_dtype"]
    wbytes = w_dtype.itemsize
    B = tokens.shape[0]
    B_pad = hidden_pad.shape[1]

    # TODO(synk): embedding gather stays in XLA (jnp.take); a Pallas DMA gather is
    # not worthwhile at one token per sequence.
    x0 = jnp.take(packed["emb"], tokens, axis=0)                    # (B, E_pad)
    x0 = jnp.pad(x0, ((0, B_pad - B), (0, 0)))                      # (B_pad, E_pad)

    # explicit scoped-VMEM budget: double-buffered streamed blocks + residents + scratch
    lstm_vmem = int(1.5 * (
        2 * B_pad * E_pad * 4                              # x0 (resident)
        + 4 * 2 * B_pad * H_pad * 4                        # h0/c0 in + h/c out blocks
        + 2 * B_pad * H_pad * 4                            # h_top (resident)
        + 2 * (E_pad + H_pad) * 4 * H_pad * wbytes         # W0 (resident, conservative x2)
        + 2 * (2 * H_pad) * 4 * H_pad * wbytes             # Wr streamed (double-buffered)
        + 2 * 4 * H_pad * 4                                # bias
        + B_pad * (E_pad + H_pad) * 4                      # xh scratch
        + B_pad * 2 * H_pad * 4                            # hh scratch
        + B_pad * 4 * H_pad * 4))                          # gate scratch
    lstm_vmem = min(max(lstm_vmem, 8 << 20), 64 << 20)

    # ---- kernel 1: LSTM stack, one layer per grid step, per-layer weights streamed.
    # input_output_aliases: each layer block l is read+written within the same grid
    # step and distinct l blocks are disjoint, so in-place update is hazard-free.
    lstm = pl.pallas_call(
        functools.partial(lstm_stack_kernel, e_pad=E_pad, hid_pad=H_pad, w_dtype=w_dtype),
        grid=(L,),
        in_specs=[
            pl.BlockSpec((B_pad, E_pad), lambda l: (0, 0)),                        # x0 (resident)
            pl.BlockSpec((1, B_pad, H_pad), lambda l: (l, 0, 0)),                  # h0[l]
            pl.BlockSpec((1, B_pad, H_pad), lambda l: (l, 0, 0)),                  # c0[l]
            pl.BlockSpec((E_pad + H_pad, 4 * H_pad), lambda l: (0, 0)),            # W0 (resident)
            pl.BlockSpec((1, 2 * H_pad, 4 * H_pad),
                         lambda l: (jnp.maximum(l - 1, 0), 0, 0)),                 # Wr[l-1]
            pl.BlockSpec((1, 1, 4 * H_pad), lambda l: (l, 0, 0)),                  # bias[l]
        ],
        out_specs=(
            pl.BlockSpec((1, B_pad, H_pad), lambda l: (l, 0, 0)),                  # h_out[l]
            pl.BlockSpec((1, B_pad, H_pad), lambda l: (l, 0, 0)),                  # c_out[l]
            pl.BlockSpec((B_pad, H_pad), lambda l: (0, 0)),                        # top-layer h
        ),
        out_shape=(
            jax.ShapeDtypeStruct((L, B_pad, H_pad), jnp.float32),
            jax.ShapeDtypeStruct((L, B_pad, H_pad), jnp.float32),
            jax.ShapeDtypeStruct((B_pad, H_pad), jnp.float32),
        ),
        scratch_shapes=[
            pltpu.VMEM((B_pad, E_pad + H_pad), jnp.float32),   # [x0 | h0] layer-0 input
            pltpu.VMEM((B_pad, 2 * H_pad), jnp.float32),       # [h_{l-1} | h_prev] carry
            pltpu.VMEM((B_pad, 4 * H_pad), jnp.float32),       # gate pre-activations
        ],
        input_output_aliases={1: 0, 2: 1},                     # update hidden/cell in place
        compiler_params=pltpu.CompilerParams(
            dimension_semantics=("arbitrary",), vmem_limit_bytes=lstm_vmem),
    )
    h_out_p, c_out_p, h_top = lstm(x0, hidden_pad, cell_pad,
                                   packed["W0"], packed["Wr"], packed["b"])

    fc_vmem = int(1.5 * (2 * B_pad * H_pad * 4
                         + 2 * H_pad * TILE_V * wbytes
                         + 2 * TILE_V * 4
                         + 2 * B_pad * TILE_V * 4))
    fc_vmem = min(max(fc_vmem, 8 << 20), 64 << 20)

    # ---- kernel 2: fc_out tiled over the vocab dimension ("parallel" grid axis)
    # TODO(synk): could be fused into the LSTM call (vocab tiles as a trailing grid
    # axis after the last layer) to save one launch + the HBM round trip of h_top.
    pred_p = pl.pallas_call(
        functools.partial(fc_kernel, w_dtype=w_dtype),
        grid=(V_pad // TILE_V,),
        in_specs=[
            pl.BlockSpec((B_pad, H_pad), lambda j: (0, 0)),
            pl.BlockSpec((H_pad, TILE_V), lambda j: (0, j)),
            pl.BlockSpec((1, TILE_V), lambda j: (0, j)),
        ],
        out_specs=pl.BlockSpec((B_pad, TILE_V), lambda j: (0, j)),
        out_shape=jax.ShapeDtypeStruct((B_pad, V_pad), jnp.float32),
        compiler_params=pltpu.CompilerParams(
            dimension_semantics=("parallel",), vmem_limit_bytes=fc_vmem),
    )(h_top, packed["w_fc"], packed["b_fc"])

    return pred_p[:B, :V], h_out_p, c_out_p


# --------------------------------------------------------------------- reference


def decoder_reference(tokens, hidden, cell, params):
    """Pure-JAX reference reproducing PyTorch semantics (for verification)."""
    L, B, H = hidden.shape
    x = params["embedding"][tokens]
    h_new_all, c_new_all = [], []
    inp = x
    for l in range(L):
        gates = (inp @ params["w_ih"][l].T + hidden[l] @ params["w_hh"][l].T
                 + params["b_ih"][l] + params["b_hh"][l])
        i = jax.nn.sigmoid(gates[:, 0 * H:1 * H])
        f = jax.nn.sigmoid(gates[:, 1 * H:2 * H])
        g = jnp.tanh(gates[:, 2 * H:3 * H])
        o = jax.nn.sigmoid(gates[:, 3 * H:4 * H])
        c_n = f * cell[l] + i * g
        h_n = o * jnp.tanh(c_n)
        h_new_all.append(h_n)
        c_new_all.append(c_n)
        inp = h_n
    pred = inp @ params["fc_w"].T + params["fc_b"]
    return pred, jnp.stack(h_new_all), jnp.stack(c_new_all)


if __name__ == "__main__":
    output_dim, emb_dim, hid_dim, n_layers = 16, 16, 32, 2
    batch = 2

    key = jax.random.PRNGKey(0)
    k_tok, k_h, k_c, k_par = jax.random.split(key, 4)

    tokens = jax.random.randint(k_tok, (batch,), 0, output_dim, dtype=jnp.int32)
    hidden = jax.random.normal(k_h, (n_layers, batch, hid_dim), jnp.float32)
    cell = jax.random.normal(k_c, (n_layers, batch, hid_dim), jnp.float32)
    params = init_params(k_par, output_dim, emb_dim, hid_dim, n_layers)

    # ---- f32 weights: exact single-step check against the reference -----------------
    packed_f32 = pack_decoder_params(params, weight_dtype=jnp.float32)
    step_f32 = jax.jit(lambda t, h, c: decoder_step(t, h, c, packed_f32))

    h_pad, c_pad = pad_state(hidden, cell, packed_f32)       # pad ONCE, carry padded state
    pred, h_pad1, c_pad1 = step_f32(tokens, h_pad, c_pad)
    jax.block_until_ready((pred, h_pad1, c_pad1))

    pred_r, h_r, c_r = decoder_reference(tokens, hidden, cell, params)
    h_out, c_out = unpad_state(h_pad1, c_pad1, batch, packed_f32)
    assert jnp.allclose(pred, pred_r, atol=1e-5), "f32 prediction mismatch"
    assert jnp.allclose(h_out, h_r, atol=1e-5), "f32 hidden mismatch"
    assert jnp.allclose(c_out, c_r, atol=1e-5), "f32 cell mismatch"

    # ---- multi-step with persistent padded state: padded lanes must stay exactly 0 --
    hp, cp = h_pad, c_pad
    hr, cr = hidden, cell
    for _ in range(4):
        pred, hp, cp = step_f32(tokens, hp, cp)
        pred_r, hr, cr = decoder_reference(tokens, hr, cr, params)
    jax.block_until_ready((pred, hp, cp))
    ho, co = unpad_state(hp, cp, batch, packed_f32)
    assert jnp.allclose(pred, pred_r, atol=1e-4), "multi-step prediction mismatch"
    assert jnp.allclose(ho, hr, atol=1e-4), "multi-step hidden mismatch"
    assert jnp.allclose(co, cr, atol=1e-4), "multi-step cell mismatch"
    assert bool((hp[:, :, hid_dim:] == 0).all()), "padded hidden lanes leaked"
    assert bool((cp[:, :, hid_dim:] == 0).all()), "padded cell lanes leaked"

    # ---- default bf16 weights (HBM-bound decode config): looser tolerance -----------
    packed_bf16 = pack_decoder_params(params)                # weight_dtype=bfloat16 default
    step_bf16 = jax.jit(lambda t, h, c: decoder_step(t, h, c, packed_bf16))
    h_pad_b, c_pad_b = pad_state(hidden, cell, packed_bf16)
    pred_b, h_pad_b, c_pad_b = step_bf16(tokens, h_pad_b, c_pad_b)
    jax.block_until_ready((pred_b, h_pad_b, c_pad_b))
    pred_r, h_r, c_r = decoder_reference(tokens, hidden, cell, params)
    h_out_b, c_out_b = unpad_state(h_pad_b, c_pad_b, batch, packed_bf16)
    assert jnp.allclose(pred_b, pred_r, atol=5e-2, rtol=5e-2), "bf16 prediction mismatch"
    assert jnp.allclose(h_out_b, h_r, atol=5e-2, rtol=5e-2), "bf16 hidden mismatch"
    assert jnp.allclose(c_out_b, c_r, atol=5e-2, rtol=5e-2), "bf16 cell mismatch"

    print("KERNEL_OK")
</pallas_src>

<mosaic_0001>
module attributes {stable_mosaic.version = 11 : i64} {
  func.func @fc_kernel(%arg0: i32, %arg1: memref<8x128xf32, #tpu.memory_space<vmem>>, %arg2: memref<128x128xf32, #tpu.memory_space<vmem>>, %arg3: memref<1x128xf32, #tpu.memory_space<vmem>>, %arg4: memref<8x128xf32, #tpu.memory_space<vmem>>) attributes {dimension_semantics = [#tpu.dimension_semantics<parallel>], iteration_bounds = array<i64: 1>, scalar_prefetch = 0 : i64, scratch_operands = 0 : i64, tpu.core_type = #tpu.core_type<tc>, window_params = [{pipeline_mode = #tpu.pipeline_mode<synchronous>, transform_indices = @transform_0, window_bounds = array<i64: 8, 128>}, {transform_indices = @transform_1, window_bounds = array<i64: 128, 128>}, {transform_indices = @transform_2, window_bounds = array<i64: 1, 128>}, {transform_indices = @transform_3, window_bounds = array<i64: 8, 128>}]} {
    %c0 = arith.constant 0 : index
    %c0_0 = arith.constant 0 : index
    %0 = vector.load %arg1[%c0, %c0_0] : memref<8x128xf32, #tpu.memory_space<vmem>>, vector<8x128xf32>
    %c0_1 = arith.constant 0 : index
    %c0_2 = arith.constant 0 : index
    %1 = vector.load %arg2[%c0_1, %c0_2] : memref<128x128xf32, #tpu.memory_space<vmem>>, vector<128x128xf32>
    %cst = arith.constant dense<0.000000e+00> : vector<8x128xf32>
    %2 = tpu.matmul %0, %1, %cst {dimension_numbers = #tpu.dot_dimension_numbers<[1], [0], [0], [1], [0, 0, 1, 1], [], []>} : vector<8x128xf32>, vector<128x128xf32>, vector<8x128xf32> -> vector<8x128xf32>
    %c0_3 = arith.constant 0 : index
    %c0_4 = arith.constant 0 : index
    %3 = vector.load %arg3[%c0_3, %c0_4] : memref<1x128xf32, #tpu.memory_space<vmem>>, vector<1x128xf32>
    %4 = vector.broadcast %3 : vector<1x128xf32> to vector<8x128xf32>
    %5 = arith.addf %2, %4 : vector<8x128xf32>
    %c0_5 = arith.constant 0 : index
    %c0_6 = arith.constant 0 : index
    %6 = vector.load %arg4[%c0_5, %c0_6] : memref<8x128xf32, #tpu.memory_space<vmem>>, vector<8x128xf32>
    tpu.vector_store %arg4[%c0_5, %c0_6], %5 {strides = array<i32>} : memref<8x128xf32, #tpu.memory_space<vmem>>, vector<8x128xf32>,
    return
  }
  func.func @transform_0(%arg0: i32) -> (i32, i32) {
    %c0_i32 = arith.constant 0 : i32
    %c0_i32_0 = arith.constant 0 : i32
    %c0_i32_1 = arith.constant 0 : i32
    return %c0_i32, %c0_i32_0 : i32, i32
  }
  func.func @transform_1(%arg0: i32) -> (i32, i32) {
    %c0_i32 = arith.constant 0 : i32
    %c0_i32_0 = arith.constant 0 : i32
    return %c0_i32, %arg0 : i32, i32
  }
  func.func @transform_2(%arg0: i32) -> (i32, i32) {
    %c0_i32 = arith.constant 0 : i32
    %c0_i32_0 = arith.constant 0 : i32
    return %c0_i32, %arg0 : i32, i32
  }
  func.func @transform_3(%arg0: i32) -> (i32, i32) {
    %c0_i32 = arith.constant 0 : i32
    %c0_i32_0 = arith.constant 0 : i32
    return %c0_i32, %arg0 : i32, i32
  }
}

module attributes {stable_mosaic.version = 11 : i64} {
  func.func @lstm_stack_kernel(%arg0: i32, %arg1: memref<8x128xf32, #tpu.memory_space<vmem>>, %arg2: memref<1x8x128xf32, #tpu.memory_space<vmem>>, %arg3: memref<1x8x128xf32, #tpu.memory_space<vmem>>, %arg4: memref<256x512xf32, #tpu.memory_space<vmem>>, %arg5: memref<1x256x512xf32, #tpu.memory_space<vmem>>, %arg6: memref<1x1x512xf32, #tpu.memory_space<vmem>>, %arg7: memref<1x8x128xf32, #tpu.memory_space<vmem>>, %arg8: memref<1x8x128xf32, #tpu.memory_space<vmem>>, %arg9: memref<8x128xf32, #tpu.memory_space<vmem>>, %arg10: memref<8x256xf32, #tpu.memory_space<vmem>>, %arg11: memref<8x256xf32, #tpu.memory_space<vmem>>, %arg12: memref<8x512xf32, #tpu.memory_space<vmem>>) attributes {dimension_semantics = [#tpu.dimension_semantics<arbitrary>], iteration_bounds = array<i64: 2>, scalar_prefetch = 0 : i64, scratch_operands = 3 : i64, tpu.core_type = #tpu.core_type<tc>, window_params = [{pipeline_mode = #tpu.pipeline_mode<synchronous>, transform_indices = @transform_0, window_bounds = array<i64: 8, 128>}, {transform_indices = @transform_1, window_bounds = array<i64: 1, 8, 128>}, {transform_indices = @transform_2, window_bounds = array<i64: 1, 8, 128>}, {pipeline_mode = #tpu.pipeline_mode<synchronous>, transform_indices = @transform_3, window_bounds = array<i64: 256, 512>}, {transform_indices = @transform_4, window_bounds = array<i64: 1, 256, 512>}, {transform_indices = @transform_5, window_bounds = array<i64: 1, 1, 512>}, {transform_indices = @transform_6, window_bounds = array<i64: 1, 8, 128>}, {transform_indices = @transform_7, window_bounds = array<i64: 1, 8, 128>}, {pipeline_mode = #tpu.pipeline_mode<synchronous>, transform_indices = @transform_8, window_bounds = array<i64: 8, 128>}]} {
    %c0 = arith.constant 0 : index
    %c0_0 = arith.constant 0 : index
    %c0_1 = arith.constant 0 : index
    %0 = vector.load %arg2[%c0, %c0_0, %c0_1] : memref<1x8x128xf32, #tpu.memory_space<vmem>>, vector<1x8x128xf32>
    %1 = vector.shape_cast %0 : vector<1x8x128xf32> to vector<8x128xf32>
    %c0_2 = arith.constant 0 : index
    %c0_3 = arith.constant 0 : index
    %c0_4 = arith.constant 0 : index
    %2 = vector.load %arg3[%c0_2, %c0_3, %c0_4] : memref<1x8x128xf32, #tpu.memory_space<vmem>>, vector<1x8x128xf32>
    %3 = vector.shape_cast %2 : vector<1x8x128xf32> to vector<8x128xf32>
    %c0_i32 = arith.constant 0 : i32
    %4 = arith.cmpi eq, %arg0, %c0_i32 : i32
    %5 = arith.extui %4 : i1 to i32
    %c0_i32_5 = arith.constant 0 : i32
    %6 = arith.cmpi ne, %5, %c0_i32_5 : i32
    scf.if %6 {
      %c0_24 = arith.constant 0 : index
      %c0_25 = arith.constant 0 : index
      %50 = vector.load %arg1[%c0_24, %c0_25] : memref<8x128xf32, #tpu.memory_space<vmem>>, vector<8x128xf32>
      %c0_26 = arith.constant 0 : index
      %c0_27 = arith.constant 0 : index
      %51 = vector.load %arg10[%c0_26, %c0_27] : memref<8x256xf32, #tpu.memory_space<vmem>>, vector<8x128xf32>
      tpu.vector_store %arg10[%c0_26, %c0_27], %50 {strides = array<i32>} : memref<8x256xf32, #tpu.memory_space<vmem>>, vector<8x128xf32>,
      %c0_28 = arith.constant 0 : index
      %c128 = arith.constant 128 : index
      %52 = vector.load %arg10[%c0_28, %c128] : memref<8x256xf32, #tpu.memory_space<vmem>>, vector<8x128xf32>
      tpu.vector_store %arg10[%c0_28, %c128], %1 {strides = array<i32>} : memref<8x256xf32, #tpu.memory_space<vmem>>, vector<8x128xf32>,
      %c0_29 = arith.constant 0 : index
      %c0_30 = arith.constant 0 : index
      %53 = vector.load %arg10[%c0_29, %c0_30] : memref<8x256xf32, #tpu.memory_space<vmem>>, vector<8x256xf32>
      %c0_31 = arith.constant 0 : index
      %c0_32 = arith.constant 0 : index
      %54 = vector.load %arg4[%c0_31, %c0_32] : memref<256x512xf32, #tpu.memory_space<vmem>>, vector<256x512xf32>
      %cst_33 = arith.constant dense<0.000000e+00> : vector<8x512xf32>
      %55 = tpu.matmul %53, %54, %cst_33 {dimension_numbers = #tpu.dot_dimension_numbers<[1], [0], [0], [1], [0, 0, 1, 1], [], []>} : vector<8x256xf32>, vector<256x512xf32>, vector<8x512xf32> -> vector<8x512xf32>
      %c0_34 = arith.constant 0 : index
      %c0_35 = arith.constant 0 : index
      %56 = vector.load %arg12[%c0_34, %c0_35] : memref<8x512xf32, #tpu.memory_space<vmem>>, vector<8x512xf32>
      tpu.vector_store %arg12[%c0_34, %c0_35], %55 {strides = array<i32>} : memref<8x512xf32, #tpu.memory_space<vmem>>, vector<8x512xf32>,
    } else {
    }
    %c0_i32_6 = arith.constant 0 : i32
    %7 = arith.cmpi sgt, %arg0, %c0_i32_6 : i32
    %8 = arith.extui %7 : i1 to i32
    %c0_i32_7 = arith.constant 0 : i32
    %9 = arith.cmpi ne, %8, %c0_i32_7 : i32
    scf.if %9 {
      %c0_24 = arith.constant 0 : index
      %c128 = arith.constant 128 : index
      %50 = vector.load %arg11[%c0_24, %c128] : memref<8x256xf32, #tpu.memory_space<vmem>>, vector<8x128xf32>
      tpu.vector_store %arg11[%c0_24, %c128], %1 {strides = array<i32>} : memref<8x256xf32, #tpu.memory_space<vmem>>, vector<8x128xf32>,
      %c0_25 = arith.constant 0 : index
      %c0_26 = arith.constant 0 : index
      %51 = vector.load %arg11[%c0_25, %c0_26] : memref<8x256xf32, #tpu.memory_space<vmem>>, vector<8x256xf32>
      %c0_27 = arith.constant 0 : index
      %c0_28 = arith.constant 0 : index
      %c0_29 = arith.constant 0 : index
      %52 = vector.load %arg5[%c0_27, %c0_28, %c0_29] : memref<1x256x512xf32, #tpu.memory_space<vmem>>, vector<1x256x512xf32>
      %53 = vector.shape_cast %52 : vector<1x256x512xf32> to vector<256x512xf32>
      %cst_30 = arith.constant dense<0.000000e+00> : vector<8x512xf32>
      %54 = tpu.matmul %51, %53, %cst_30 {dimension_numbers = #tpu.dot_dimension_numbers<[1], [0], [0], [1], [0, 0, 1, 1], [], []>} : vector<8x256xf32>, vector<256x512xf32>, vector<8x512xf32> -> vector<8x512xf32>
      %c0_31 = arith.constant 0 : index
      %c0_32 = arith.constant 0 : index
      %55 = vector.load %arg12[%c0_31, %c0_32] : memref<8x512xf32, #tpu.memory_space<vmem>>, vector<8x512xf32>
      tpu.vector_store %arg12[%c0_31, %c0_32], %54 {strides = array<i32>} : memref<8x512xf32, #tpu.memory_space<vmem>>, vector<8x512xf32>,
    } else {
    }
    %c0_8 = arith.constant 0 : index
    %c0_9 = arith.constant 0 : index
    %10 = vector.load %arg12[%c0_8, %c0_9] : memref<8x512xf32, #tpu.memory_space<vmem>>, vector<8x512xf32>
    %c0_10 = arith.constant 0 : index
    %c0_11 = arith.constant 0 : index
    %c0_12 = arith.constant 0 : index
    %11 = vector.load %arg6[%c0_10, %c0_11, %c0_12] : memref<1x1x512xf32, #tpu.memory_space<vmem>>, vector<1x1x512xf32>
    %12 = vector.shape_cast %11 : vector<1x1x512xf32> to vector<1x512xf32>
    %13 = vector.broadcast %12 : vector<1x512xf32> to vector<8x512xf32>
    %14 = arith.addf %10, %13 : vector<8x512xf32>
    %15 = vector.extract_strided_slice %14 {offsets = [0, 0], sizes = [8, 128], strides = [1, 1]} : vector<8x512xf32> to vector<8x128xf32>
    %16 = arith.negf %15 : vector<8x128xf32>
    %17 = math.exp %16 : vector<8x128xf32>
    %cst = arith.constant 1.000000e+00 : f32
    %18 = vector.broadcast %cst : f32 to vector<8x128xf32>
    %19 = arith.addf %18, %17 : vector<8x128xf32>
    %20 = arith.divf %18, %19 : vector<8x128xf32>
    %21 = vector.extract_strided_slice %14 {offsets = [0, 128], sizes = [8, 128], strides = [1, 1]} : vector<8x512xf32> to vector<8x128xf32>
    %22 = arith.negf %21 : vector<8x128xf32>
    %23 = math.exp %22 : vector<8x128xf32>
    %cst_13 = arith.constant 1.000000e+00 : f32
    %24 = vector.broadcast %cst_13 : f32 to vector<8x128xf32>
    %25 = arith.addf %24, %23 : vector<8x128xf32>
    %26 = arith.divf %24, %25 : vector<8x128xf32>
    %27 = vector.extract_strided_slice %14 {offsets = [0, 256], sizes = [8, 128], strides = [1, 1]} : vector<8x512xf32> to vector<8x128xf32>
    %28 = math.tanh %27 : vector<8x128xf32>
    %29 = vector.extract_strided_slice %14 {offsets = [0, 384], sizes = [8, 128], strides = [1, 1]} : vector<8x512xf32> to vector<8x128xf32>
    %30 = arith.negf %29 : vector<8x128xf32>
    %31 = math.exp %30 : vector<8x128xf32>
    %cst_14 = arith.constant 1.000000e+00 : f32
    %32 = vector.broadcast %cst_14 : f32 to vector<8x128xf32>
    %33 = arith.addf %32, %31 : vector<8x128xf32>
    %34 = arith.divf %32, %33 : vector<8x128xf32>
    %35 = arith.mulf %26, %3 : vector<8x128xf32>
    %36 = arith.mulf %20, %28 : vector<8x128xf32>
    %37 = arith.addf %35, %36 : vector<8x128xf32>
    %38 = math.tanh %37 : vector<8x128xf32>
    %39 = arith.mulf %34, %38 : vector<8x128xf32>
    %c0_15 = arith.constant 0 : index
    %c0_16 = arith.constant 0 : index
    %c0_17 = arith.constant 0 : index
    %40 = vector.load %arg7[%c0_15, %c0_16, %c0_17] : memref<1x8x128xf32, #tpu.memory_space<vmem>>, vector<1x8x128xf32>
    %41 = vector.shape_cast %40 : vector<1x8x128xf32> to vector<8x128xf32>
    %42 = vector.shape_cast %39 : vector<8x128xf32> to vector<1x8x128xf32>
    tpu.vector_store %arg7[%c0_15, %c0_16, %c0_17], %42 {strides = array<i32>} : memref<1x8x128xf32, #tpu.memory_space<vmem>>, vector<1x8x128xf32>,
    %c0_18 = arith.constant 0 : index
    %c0_19 = arith.constant 0 : index
    %c0_20 = arith.constant 0 : index
    %43 = vector.load %arg8[%c0_18, %c0_19, %c0_20] : memref<1x8x128xf32, #tpu.memory_space<vmem>>, vector<1x8x128xf32>
    %44 = vector.shape_cast %43 : vector<1x8x128xf32> to vector<8x128xf32>
    %45 = vector.shape_cast %37 : vector<8x128xf32> to vector<1x8x128xf32>
    tpu.vector_store %arg8[%c0_18, %c0_19, %c0_20], %45 {strides = array<i32>} : memref<1x8x128xf32, #tpu.memory_space<vmem>>, vector<1x8x128xf32>,
    %c0_21 = arith.constant 0 : index
    %c0_22 = arith.constant 0 : index
    %46 = vector.load %arg11[%c0_21, %c0_22] : memref<8x256xf32, #tpu.memory_space<vmem>>, vector<8x128xf32>
    tpu.vector_store %arg11[%c0_21, %c0_22], %39 {strides = array<i32>} : memref<8x256xf32, #tpu.memory_space<vmem>>, vector<8x128xf32>,
    %c1_i32 = arith.constant 1 : i32
    %47 = arith.cmpi eq, %arg0, %c1_i32 : i32
    %48 = arith.extui %47 : i1 to i32
    %c0_i32_23 = arith.constant 0 : i32
    %49 = arith.cmpi ne, %48, %c0_i32_23 : i32
    scf.if %49 {
      %c0_24 = arith.constant 0 : index
      %c0_25 = arith.constant 0 : index
      %50 = vector.load %arg9[%c0_24, %c0_25] : memref<8x128xf32, #tpu.memory_space<vmem>>, vector<8x128xf32>
      tpu.vector_store %arg9[%c0_24, %c0_25], %39 {strides = array<i32>} : memref<8x128xf32, #tpu.memory_space<vmem>>, vector<8x128xf32>,
    } else {
    }
    return
  }
  func.func @transform_0(%arg0: i32) -> (i32, i32) {
    %c0_i32 = arith.constant 0 : i32
    %c0_i32_0 = arith.constant 0 : i32
    %c0_i32_1 = arith.constant 0 : i32
    return %c0_i32, %c0_i32_0 : i32, i32
  }
  func.func @transform_1(%arg0: i32) -> (i32, i32, i32) {
    %c0_i32 = arith.constant 0 : i32
    %c0_i32_0 = arith.constant 0 : i32
    %c0_i32_1 = arith.constant 0 : i32
    return %arg0, %c0_i32, %c0_i32_0 : i32, i32, i32
  }
  func.func @transform_2(%arg0: i32) -> (i32, i32, i32) {
    %c0_i32 = arith.constant 0 : i32
    %c0_i32_0 = arith.constant 0 : i32
    %c0_i32_1 = arith.constant 0 : i32
    return %arg0, %c0_i32, %c0_i32_0 : i32, i32, i32
  }
  func.func @transform_3(%arg0: i32) -> (i32, i32) {
    %c0_i32 = arith.constant 0 : i32
    %c0_i32_0 = arith.constant 0 : i32
    %c0_i32_1 = arith.constant 0 : i32
    return %c0_i32, %c0_i32_0 : i32, i32
  }
  func.func @transform_4(%arg0: i32) -> (i32, i32, i32) {
    %c1_i32 = arith.constant 1 : i32
    %0 = arith.subi %arg0, %c1_i32 : i32
    %c0_i32 = arith.constant 0 : i32
    %1 = arith.maxsi %0, %c0_i32 : i32
    %c0_i32_0 = arith.constant 0 : i32
    %c0_i32_1 = arith.constant 0 : i32
    %c0_i32_2 = arith.constant 0 : i32
    return %1, %c0_i32_0, %c0_i32_1 : i32, i32, i32
  }
  func.func @transform_5(%arg0: i32) -> (i32, i32, i32) {
    %c0_i32 = arith.constant 0 : i32
    %c0_i32_0 = arith.constant 0 : i32
    %c0_i32_1 = arith.constant 0 : i32
    return %arg0, %c0_i32, %c0_i32_0 : i32, i32, i32
  }
  func.func @transform_6(%arg0: i32) -> (i32, i32, i32) {
    %c0_i32 = arith.constant 0 : i32
    %c0_i32_0 = arith.constant 0 : i32
    %c0_i32_1 = arith.constant 0 : i32
    return %arg0, %c0_i32, %c0_i32_0 : i32, i32, i32
  }
  func.func @transform_7(%arg0: i32) -> (i32, i32, i32) {
    %c0_i32 = arith.constant 0 : i32
    %c0_i32_0 = arith.constant 0 : i32
    %c0_i32_1 = arith.constant 0 : i32
    return %arg0, %c0_i32, %c0_i32_0 : i32, i32, i32
  }
  func.func @transform_8(%arg0: i32) -> (i32, i32) {
    %c0_i32 = arith.constant 0 : i32
    %c0_i32_0 = arith.constant 0 : i32
    %c0_i32_1 = arith.constant 0 : i32
    return %c0_i32, %c0_i32_0 : i32, i32
  }
}

</mosaic_0001>

<llo_original>
// kernel: _lambda_.3
$region0: #{_lambda_.3}
  #allocation0 [shape = 'u32[]', space=smem, size = 0x4, offset = 0x4, fixed_abs, tag = 'smem constant byte address 0x4 - core index']
  #allocation1 [shape = 'u32[144,128]{1,0:T(1,128)}', space=vmem, size = 0x12000, scoped, tag = 'internal scratch']
  %s0 = inlined_call_operand.vmem [shape: f32[8,128], index: 0, kind: input, shape index: {}]
  %s1 = inlined_call_operand.vmem [shape: f32[128,128], index: 1, kind: input, shape index: {}]
  %s2 = inlined_call_operand.vmem [shape: f32[1,128], index: 2, kind: input, shape index: {}]
  %s3 = inlined_call_operand.vmem [shape: f32[8,128], index: 3, kind: output, shape index: {}]
  %s4 = sld [smem:[#allocation0]]
  $region22: #{_lambda_.3} parent=0
    _
  %s6 = ssub.s32 1, %s4
  %s7 = scalar_select 0, %s6, %s4
  // Predicated region
  $region2: #{_lambda_.3} parent=0 // pred_check
    _
  $region3: #{_lambda_.3} parent=0 // pred_check_branch
    %9 = sbr.rel (0) target = $region5
  $region4: #{_lambda_.3} parent=0 // pred_region
    _
  $region5: #{_lambda_.3} parent=0 // pred_fallthru
    _
  // Predicated region
  $region6: #{_lambda_.3} parent=0 // pred_check
    _
  $region7: #{_lambda_.3} parent=0 // pred_check_branch
    %11 = sbr.rel (0) target = $region9
  $region8: #{_lambda_.3} parent=0 // pred_region
    _
  $region9: #{_lambda_.3} parent=0 // pred_fallthru
    _
  // Predicated region
  $region10: #{_lambda_.3} parent=0 // pred_check
    _
  $region11: #{_lambda_.3} parent=0 // pred_check_branch
    %13 = sbr.rel (0) target = $region13
  $region12: #{_lambda_.3} parent=0 // pred_region
    _
  $region13: #{_lambda_.3} parent=0 // pred_fallthru
    _
  %v14 = vld [vmem:[%s0] sm:$0xff]
  %v15 = vld [vmem:[%s1] sm:$0xff]
  %v16 = vld [vmem:[%s1 + $0x8] sm:$0xff]
  %v17 = vld [vmem:[%s1 + $0x10] sm:$0xff]
  %v18 = vld [vmem:[%s1 + $0x18] sm:$0xff]
  %v19 = vld [vmem:[%s1 + $0x20] sm:$0xff]
  %v20 = vld [vmem:[%s1 + $0x28] sm:$0xff]
  %v21 = vld [vmem:[%s1 + $0x30] sm:$0xff]
  %v22 = vld [vmem:[%s1 + $0x38] sm:$0xff]
  %v23 = vld [vmem:[%s1 + $0x40] sm:$0xff]
  %v24 = vld [vmem:[%s1 + $0x48] sm:$0xff]
  %v25 = vld [vmem:[%s1 + $0x50] sm:$0xff]
  %v26 = vld [vmem:[%s1 + $0x58] sm:$0xff]
  %v27 = vld [vmem:[%s1 + $0x60] sm:$0xff]
  %v28 = vld [vmem:[%s1 + $0x68] sm:$0xff]
  %v29 = vld [vmem:[%s1 + $0x70] sm:$0xff]
  %v30 = vld [vmem:[%s1 + $0x78] sm:$0xff]
  %v31 = vld [vmem:[%s2] sm:$0x1]
  %v33 = vlaneseq
  %v34 = vshrl.u32 %v33, 7
  %v35 = vsub.s32 0, %v34
  %v36 = vrot.slane %v31, %v35
  %38 = vmatprep.subr.mxu0 0.0
  %39 = vmatpush1.msra.mxu0 %v30
  %40 = vmatprep.subr.mxu0 0.0
  %41 = vmatpush1.msra.mxu0 %v29
  %42 = vmatprep.subr.mxu0 0.0
  %43 = vmatpush1.msra.mxu0 %v28
  %44 = vmatprep.subr.mxu0 0.0
  %45 = vmatpush1.msra.mxu0 %v27
  %46 = vmatprep.subr.mxu0 0.0
  %47 = vmatpush1.msra.mxu0 %v26
  %48 = vmatprep.subr.mxu0 0.0
  %49 = vmatpush1.msra.mxu0 %v25
  %50 = vmatprep.subr.mxu0 0.0
  %51 = vmatpush1.msra.mxu0 %v24
  %52 = vmatprep.subr.mxu0 0.0
  %53 = vmatpush1.msra.mxu0 %v23
  %54 = vmatprep.subr.mxu0 0.0
  %55 = vmatpush1.msra.mxu0 %v22
  %56 = vmatprep.subr.mxu0 0.0
  %57 = vmatpush1.msra.mxu0 %v21
  %58 = vmatprep.subr.mxu0 0.0
  %59 = vmatpush1.msra.mxu0 %v20
  %60 = vmatprep.subr.mxu0 0.0
  %61 = vmatpush1.msra.mxu0 %v19
  %62 = vmatprep.subr.mxu0 0.0
  %63 = vmatpush1.msra.mxu0 %v18
  %64 = vmatprep.subr.mxu0 0.0
  %65 = vmatpush1.msra.mxu0 %v17
  %66 = vmatprep.subr.mxu0 0.0
  %67 = vmatpush1.msra.mxu0 %v16
  %68 = vmatprep.subr.mxu0 0.0
  %69 = vmatpush1.msra.mxu0 %v15
  %70 = vmatprep.subr.mxu0 0.0
  %71 = vmatpush2.msra.mxu0 0.0
  %72 = vmatprep.subr.mxu0 0.0
  %73 = vmatpush2.msra.mxu0 0.0
  %74 = vmatprep.subr.mxu0 0.0
  %75 = vmatpush2.msra.mxu0 0.0
  %76 = vmatprep.subr.mxu0 0.0
  %77 = vmatpush2.msra.mxu0 0.0
  %78 = vmatprep.subr.mxu0 0.0
  %79 = vmatpush2.msra.mxu0 0.0
  %80 = vmatprep.subr.mxu0 0.0
  %81 = vmatpush2.msra.mxu0 0.0
  %82 = vmatprep.subr.mxu0 0.0
  %83 = vmatpush2.msra.mxu0 0.0
  %84 = vmatprep.subr.mxu0 0.0
  %85 = vmatpush2.msra.mxu0 0.0
  %86 = vmatprep.subr.mxu0 0.0
  %87 = vmatpush2.msra.mxu0 0.0
  %88 = vmatprep.subr.mxu0 0.0
  %89 = vmatpush2.msra.mxu0 0.0
  %90 = vmatprep.subr.mxu0 0.0
  %91 = vmatpush2.msra.mxu0 0.0
  %92 = vmatprep.subr.mxu0 0.0
  %93 = vmatpush2.msra.mxu0 0.0
  %94 = vmatprep.subr.mxu0 0.0
  %95 = vmatpush2.msra.mxu0 0.0
  %96 = vmatprep.subr.mxu0 0.0
  %97 = vmatpush2.msra.mxu0 0.0
  %98 = vmatprep.subr.mxu0 0.0
  %99 = vmatpush2.msra.mxu0 0.0
  %100 = vmatprep.subr.mxu0 0.0
  %101 = vmatpush2.msra.mxu0 0.0
  %102 = vmatprep.mubr.f32.mxu0 0.0
  %103 = vmatmul.mubr.f32.gmra.mxu0 %v14
  %v104 = vpop.f32.mrf.mxu0
  %v105 = vadd.f32 %v36, %v104
  %v106 = vpop.f32.mrf.mxu0
  %107 = vdwg.mxu0
  %108 = vst [vmem:[%s3] sm:$0xff] %v105
  // Predicated region
  $region14: #{_lambda_.3} parent=0 // pred_check
    _
  $region15: #{_lambda_.3} parent=0 // pred_check_branch
    %110 = sbr.rel (0) target = $region17
  $region16: #{_lambda_.3} parent=0 // pred_region
    _
  $region17: #{_lambda_.3} parent=0 // pred_fallthru
    _
  // Predicated region
  $region18: #{_lambda_.3} parent=0 // pred_check
    _
  $region19: #{_lambda_.3} parent=0 // pred_check_branch
    %112 = sbr.rel (0) target = $region21
  $region20: #{_lambda_.3} parent=0 // pred_region
    _
  $region21: #{_lambda_.3} parent=0 // pred_fallthru
    _

// kernel: _lambda_.2
$region0: #{_lambda_.2}
  #allocation0 [shape = 'u32[]', space=smem, size = 0x4, offset = 0x4, fixed_abs, tag = 'smem constant byte address 0x4 - core index']
  #allocation1 [shape = 'u32[144,128]{1,0:T(1,128)}', space=vmem, size = 0x12000, scoped, tag = 'internal scratch']
  #allocation2 [shape = 'f32[8,256]{1,0:T(8,128)}', space=vmem, size = 0x2000, scoped, tag = 'scratch operand']
  #allocation3 [shape = 'f32[8,256]{1,0:T(8,128)}', space=vmem, size = 0x2000, scoped, tag = 'scratch operand']
  #allocation4 [shape = 'f32[8,512]{1,0:T(8,128)}', space=vmem, size = 0x4000, scoped, tag = 'scratch operand']
  %s0 = inlined_call_operand.vmem [shape: f32[8,128], index: 0, kind: input, shape index: {}]
  %s1 = inlined_call_operand.vmem [shape: f32[2,8,128], index: 1, kind: input, shape index: {}, may-alias: {1,6}]
  %s2 = inlined_call_operand.vmem [shape: f32[2,8,128], index: 2, kind: input, shape index: {}, may-alias: {2,7}]
  %s3 = inlined_call_operand.hbm [shape: f32[256,512], index: 3, kind: input, shape index: {}]
  %s4 = inlined_call_operand.hbm [shape: f32[1,256,512], index: 4, kind: input, shape index: {}]
  %s5 = inlined_call_operand.vmem [shape: f32[2,1,512], index: 5, kind: input, shape index: {}]
  %s6 = inlined_call_operand.vmem [shape: f32[2,8,128], index: 6, kind: output, shape index: {0}, may-alias: {1,6}]
  %s7 = inlined_call_operand.vmem [shape: f32[2,8,128], index: 7, kind: output, shape index: {1}, may-alias: {2,7}]
  %s8 = inlined_call_operand.vmem [shape: f32[8,128], index: 8, kind: output, shape index: {2}]
  %9 = xla_tuple %s6, %s7, %s8
  %s10 = sld [smem:[#allocation0]]
  $region93: #{_lambda_.2} parent=0
    _
  %s12 = ssub.s32 1, %s10
  %s13 = scalar_select 0, %s12, %s10
  $region1: #{_lambda_.2} parent=0
    #allocation5 [shape = 'u8[524288]{0}', space=vmem, size = 0x80000, scoped, tag = 'input window, operand 3, single buffered']
    #allocation6 [shape = 's32[2]{0}', space=sflag, size = 0x8, scoped, tag = 'scoped memory for _lambda_.2']
    #allocation7 [shape = 'u8[1048576]{0}', space=vmem, size = 0x100000, scoped, tag = 'input window, operand 4']
    #allocation8 [shape = 's32[2]{0}', space=sflag, size = 0x8, scoped, tag = 'scoped memory for _lambda_.2']
    %14 = vsyncpa [#allocation6], 0
    %15 = vsyncpa [#allocation8], 0
    %s16 = scalar_lea.sflag [#allocation8], 1
    %17 = vsyncpa %s16, 0
    loop: start=0, step=1, limit=4
    $region2: #{_lambda_.2} parent=1 // loop_pre_header
      _
    $region3: #{_lambda_.2} parent=1 // loop_header
      %s19 = sphi 0, %s23
      %p20 = scmp.ge.s32.totalorder %s19, 4
      %s27 = sphi 0, %s27
      %s29 = sphi 0, %s27
      %s30 = sphi 0, %s29
      %s44 = sphi 0, %s30
      %s50 = sphi 0, %s52
      %s53 = sphi 0, %s50
      %s54 = sphi 0, %s53
      %s70 = sphi 0, %s54
      %s76 = sphi 0, %s78
      %s79 = sphi 0, %s76
      %s80 = sphi 0, %s79
      %s96 = sphi 0, %s80
      %s100 = sphi 0, %s100
      %s102 = sphi 0, %s100
      %s103 = sphi 0, %s102
      %s117 = sphi 0, %s103
      %s129 = sphi 0, %s131
      %s132 = sphi 0, %s129
      %s133 = sphi 0, %s132
      %s149 = sphi 0, %s133
      %s155 = sphi 0, %s157
      %s158 = sphi 0, %s155
      %s159 = sphi 0, %s158
      %s175 = sphi 0, %s159
      %s181 = sphi 0, %s183
      %s184 = sphi 0, %s181
      %s185 = sphi 0, %s184
      %s201 = sphi 0, %s185
      %s207 = sphi 0, %s209
      %s210 = sphi 0, %s207
      %s211 = sphi 0, %s210
      %s227 = sphi 0, %s211
      %s231 = sphi 0, %s231
      %s233 = sphi 0, %s231
      %s234 = sphi 0, %s233
      %s248 = sphi 0, %s234
    $region4: #{_lambda_.2} parent=1 // loop_header_branch
      %22 = sbr.rel (%p20) target = $region8
    $region5: #{_lambda_.2} parent=1 // loop_body
      %s24 = ssub.s32 %s19, 1
      %s25 = ssub.s32 %s19, 2
      %s26 = sadd.s32 %s19, 1
      %s28 = sadd.s32 %s27, 1
      %p31 = scmp.eq.s32.totalorder %s19, 1
      %p32 = scmp.ne.s32.totalorder %s27, %s29
      %p33 = scmp.eq.s32.totalorder %s19, 0
      %p34 = por %p32, %p33
      %p35 = scmp.ne.s32.totalorder %s27, %s29
      %p36 = scmp.eq.s32.totalorder %s24, 1
      %p37 = por %p35, %p36
      %p38 = scmp.ne.s32.totalorder %s29, %s30
      %p39 = scmp.eq.s32.totalorder %s24, 0
      %p40 = por %p38, %p39
      %p41 = scmp.ne.s32.totalorder %s29, %s30
      %p42 = scmp.eq.s32.totalorder %s25, 1
      %p43 = por %p41, %p42
      %p45 = scmp.ne.s32.totalorder %s30, %s44
      %p46 = scmp.eq.s32.totalorder %s25, 0
      %p47 = por %p45, %p46
      %s48 = ssub.s32 %s19, %s26
      %p49 = scmp.eq.s32.totalorder %s48, 0
      %s51 = sadd.s32 %s50, 1
      %s52 = scalar_select %p49, %s50, %s51
      %p55 = pneg %p49
      %p56 = scmp.eq.s32.totalorder %s19, 1
      %p57 = por %p55, %p56
      %p58 = scmp.ne.s32.totalorder %s50, %s53
      %p59 = scmp.eq.s32.totalorder %s19, 0
      %p60 = por %p58, %p59
      %p61 = scmp.ne.s32.totalorder %s50, %s53
      %p62 = scmp.eq.s32.totalorder %s24, 1
      %p63 = por %p61, %p62
      %p64 = scmp.ne.s32.totalorder %s53, %s54
      %p65 = scmp.eq.s32.totalorder %s24, 0
      %p66 = por %p64, %p65
      %p67 = scmp.ne.s32.totalorder %s53, %s54
      %p68 = scmp.eq.s32.totalorder %s25, 1
      %p69 = por %p67, %p68
      %p71 = scmp.ne.s32.totalorder %s54, %s70
      %p72 = scmp.eq.s32.totalorder %s25, 0
      %p73 = por %p71, %p72
      %s74 = ssub.s32 %s19, %s26
      %p75 = scmp.eq.s32.totalorder %s74, 0
      %s77 = sadd.s32 %s76, 1
      %s78 = scalar_select %p75, %s76, %s77
      %p81 = pneg %p75
      %p82 = scmp.eq.s32.totalorder %s19, 1
      %p83 = por %p81, %p82
      %p84 = scmp.ne.s32.totalorder %s76, %s79
      %p85 = scmp.eq.s32.totalorder %s19, 0
      %p86 = por %p84, %p85
      %p87 = scmp.ne.s32.totalorder %s76, %s79
      %p88 = scmp.eq.s32.totalorder %s24, 1
      %p89 = por %p87, %p88
      %p90 = scmp.ne.s32.totalorder %s79, %s80
      %p91 = scmp.eq.s32.totalorder %s24, 0
      %p92 = por %p90, %p91
      %p93 = scmp.ne.s32.totalorder %s79, %s80
      %p94 = scmp.eq.s32.totalorder %s25, 1
      %p95 = por %p93, %p94
      %p97 = scmp.ne.s32.totalorder %s80, %s96
      %p98 = scmp.eq.s32.totalorder %s25, 0
      %p99 = por %p97, %p98
      %s101 = sadd.s32 %s100, 1
      %p104 = scmp.eq.s32.totalorder %s19, 1
      %p105 = scmp.ne.s32.totalorder %s100, %s102
      %p106 = scmp.eq.s32.totalorder %s19, 0
      %p107 = por %p105, %p106
      %p108 = scmp.ne.s32.totalorder %s100, %s102
      %p109 = scmp.eq.s32.totalorder %s24, 1
      %p110 = por %p108, %p109
      %p111 = scmp.ne.s32.totalorder %s102, %s103
      %p112 = scmp.eq.s32.totalorder %s24, 0
      %p113 = por %p111, %p112
      %p114 = scmp.ne.s32.totalorder %s102, %s103
      %p115 = scmp.eq.s32.totalorder %s25, 1
      %p116 = por %p114, %p115
      %p118 = scmp.ne.s32.totalorder %s103, %s117
      %p119 = scmp.eq.s32.totalorder %s25, 0
      %p120 = por %p118, %p119
      %s121 = ssub.s32 %s19, 1
      %p122 = scmp.gt.s32.totalorder %s121, 0
      %s123 = scalar_select %p122, %s121, 0
      %s124 = ssub.s32 %s26, 1
      %p125 = scmp.gt.s32.totalorder %s124, 0
      %s126 = scalar_select %p125, %s124, 0
      %s127 = ssub.s32 %s123, %s126
      %p128 = scmp.eq.s32.totalorder %s127, 0
      %s130 = sadd.s32 %s129, 1
      %s131 = scalar_select %p128, %s129, %s130
      %p134 = pneg %p128
      %p135 = scmp.eq.s32.totalorder %s19, 1
      %p136 = por %p134, %p135
      %p137 = scmp.ne.s32.totalorder %s129, %s132
      %p138 = scmp.eq.s32.totalorder %s19, 0
      %p139 = por %p137, %p138
      %p140 = scmp.ne.s32.totalorder %s129, %s132
      %p141 = scmp.eq.s32.totalorder %s24, 1
      %p142 = por %p140, %p141
      %p143 = scmp.ne.s32.totalorder %s132, %s133
      %p144 = scmp.eq.s32.totalorder %s24, 0
      %p145 = por %p143, %p144
      %p146 = scmp.ne.s32.totalorder %s132, %s133
      %p147 = scmp.eq.s32.totalorder %s25, 1
      %p148 = por %p146, %p147
      %p150 = scmp.ne.s32.totalorder %s133, %s149
      %p151 = scmp.eq.s32.totalorder %s25, 0
      %p152 = por %p150, %p151
      %s153 = ssub.s32 %s19, %s26
      %p154 = scmp.eq.s32.totalorder %s153, 0
      %s156 = sadd.s32 %s155, 1
      %s157 = scalar_select %p154, %s155, %s156
      %p160 = pneg %p154
      %p161 = scmp.eq.s32.totalorder %s19, 1
      %p162 = por %p160, %p161
      %p163 = scmp.ne.s32.totalorder %s155, %s158
      %p164 = scmp.eq.s32.totalorder %s19, 0
      %p165 = por %p163, %p164
      %p166 = scmp.ne.s32.totalorder %s155, %s158
      %p167 = scmp.eq.s32.totalorder %s24, 1
      %p168 = por %p166, %p167
      %p169 = scmp.ne.s32.totalorder %s158, %s159
      %p170 = scmp.eq.s32.totalorder %s24, 0
      %p171 = por %p169, %p170
      %p172 = scmp.ne.s32.totalorder %s158, %s159
      %p173 = scmp.eq.s32.totalorder %s25, 1
      %p174 = por %p172, %p173
      %p176 = scmp.ne.s32.totalorder %s159, %s175
      %p177 = scmp.eq.s32.totalorder %s25, 0
      %p178 = por %p176, %p177
      %s179 = ssub.s32 %s19, %s26
      %p180 = scmp.eq.s32.totalorder %s179, 0
      %s182 = sadd.s32 %s181, 1
      %s183 = scalar_select %p180, %s181, %s182
      %p186 = pneg %p180
      %p187 = scmp.eq.s32.totalorder %s19, 1
      %p188 = por %p186, %p187
      %p189 = scmp.ne.s32.totalorder %s181, %s184
      %p190 = scmp.eq.s32.totalorder %s19, 0
      %p191 = por %p189, %p190
      %p192 = scmp.ne.s32.totalorder %s181, %s184
      %p193 = scmp.eq.s32.totalorder %s24, 1
      %p194 = por %p192, %p193
      %p195 = scmp.ne.s32.totalorder %s184, %s185
      %p196 = scmp.eq.s32.totalorder %s24, 0
      %p197 = por %p195, %p196
      %p198 = scmp.ne.s32.totalorder %s184, %s185
      %p199 = scmp.eq.s32.totalorder %s25, 1
      %p200 = por %p198, %p199
      %p202 = scmp.ne.s32.totalorder %s185, %s201
      %p203 = scmp.eq.s32.totalorder %s25, 0
      %p204 = por %p202, %p203
      %s205 = ssub.s32 %s19, %s26
      %p206 = scmp.eq.s32.totalorder %s205, 0
      %s208 = sadd.s32 %s207, 1
      %s209 = scalar_select %p206, %s207, %s208
      %p212 = pneg %p206
      %p213 = scmp.eq.s32.totalorder %s19, 1
      %p214 = por %p212, %p213
      %p215 = scmp.ne.s32.totalorder %s207, %s210
      %p216 = scmp.eq.s32.totalorder %s19, 0
      %p217 = por %p215, %p216
      %p218 = scmp.ne.s32.totalorder %s207, %s210
      %p219 = scmp.eq.s32.totalorder %s24, 1
      %p220 = por %p218, %p219
      %p221 = scmp.ne.s32.totalorder %s210, %s211
      %p222 = scmp.eq.s32.totalorder %s24, 0
      %p223 = por %p221, %p222
      %p224 = scmp.ne.s32.totalorder %s210, %s211
      %p225 = scmp.eq.s32.totalorder %s25, 1
      %p226 = por %p224, %p225
      %p228 = scmp.ne.s32.totalorder %s211, %s227
      %p229 = scmp.eq.s32.totalorder %s25, 0
      %p230 = por %p228, %p229
      %s232 = sadd.s32 %s231, 1
      %p235 = scmp.eq.s32.totalorder %s19, 1
      %p236 = scmp.ne.s32.totalorder %s231, %s233
      %p237 = scmp.eq.s32.totalorder %s19, 0
      %p238 = por %p236, %p237
      %p239 = scmp.ne.s32.totalorder %s231, %s233
      %p240 = scmp.eq.s32.totalorder %s24, 1
      %p241 = por %p239, %p240
      %p242 = scmp.ne.s32.totalorder %s233, %s234
      %p243 = scmp.eq.s32.totalorder %s24, 0
      %p244 = por %p242, %p243
      %p245 = scmp.ne.s32.totalorder %s233, %s234
      %p246 = scmp.eq.s32.totalorder %s25, 1
      %p247 = por %p245, %p246
      %p249 = scmp.ne.s32.totalorder %s234, %s248
      %p250 = scmp.eq.s32.totalorder %s25, 0
      %p251 = por %p249, %p250
      %p252 = scmp.le.s32.totalorder 1, %s19
      %p253 = scmp.lt.s32.totalorder %s19, 3
      %p254 = pnand %p252, %p253
      %p255 = pneg %p254
      // Predicated region
      $region9: #{_lambda_.2} parent=5 // pred_check
        _
      $region10: #{_lambda_.2} parent=5 // pred_check_branch
        %257 = sbr.rel (%p254) target = $region12
      $region11: #{_lambda_.2} parent=5 // pred_region
        %s258 = ssub.s32 %s19, 1
        // Predicated region
        $region13: #{_lambda_.2} parent=11 // pred_check
          %p259 = pneg %p40
        $region14: #{_lambda_.2} parent=11 // pred_check_branch
          %261 = sbr.rel (%p259) target = $region16
        $region15: #{_lambda_.2} parent=11 // pred_region
          _
        $region16: #{_lambda_.2} parent=11 // pred_fallthru
          _
        // Predicated region
        $region17: #{_lambda_.2} parent=11 // pred_check
          %p262 = pneg %p113
        $region18: #{_lambda_.2} parent=11 // pred_check_branch
          %264 = sbr.rel (%p262) target = $region20
        $region19: #{_lambda_.2} parent=11 // pred_region
          %s266 = ssub.s32 16384, 16384
          %267 = vsyncadd [#allocation6], %s266
          %s268 = sshll.u32 [#allocation5], 4
          %s269 = int_to_ptr.vmem [resolvable:$true] %s268
          %274 = dma.hbm_to_vmem [thread:$0]  %s3, 16384, %s269, [#allocation6], 512, 512, 32
        $region20: #{_lambda_.2} parent=11 // pred_fallthru
          _
      $region12: #{_lambda_.2} parent=5 // pred_fallthru
        _
      %p275 = scmp.lt.s32.totalorder %s19, 2
      // Predicated region
      $region21: #{_lambda_.2} parent=5 // pred_check
        %p276 = pneg %p275
      $region22: #{_lambda_.2} parent=5 // pred_check_branch
        %278 = sbr.rel (%p276) target = $region24
      $region23: #{_lambda_.2} parent=5 // pred_region
        // Predicated region
        $region25: #{_lambda_.2} parent=23 // pred_check
          %p279 = pneg %p60
        $region26: #{_lambda_.2} parent=23 // pred_check_branch
          %281 = sbr.rel (%p279) target = $region28
        $region27: #{_lambda_.2} parent=23 // pred_region
          %p282 = scmp.lt.s32.totalorder %s19, 1
          %s283 = scalar_select %p282, %s19, 1
          %s284 = smul.addr %s283, 8
          %s285 = scalar_lea.vmem %s1, %s284
        $region28: #{_lambda_.2} parent=23 // pred_fallthru
          _
        // Predicated region
        $region29: #{_lambda_.2} parent=23 // pred_check
          %p286 = pneg %p86
        $region30: #{_lambda_.2} parent=23 // pred_check_branch
          %288 = sbr.rel (%p286) target = $region32
        $region31: #{_lambda_.2} parent=23 // pred_region
          %p289 = scmp.lt.s32.totalorder %s19, 1
          %s290 = scalar_select %p289, %s19, 1
          %s291 = smul.addr %s290, 8
          %s292 = scalar_lea.vmem %s2, %s291
        $region32: #{_lambda_.2} parent=23 // pred_fallthru
          _
        // Predicated region
        $region33: #{_lambda_.2} parent=23 // pred_check
          %p293 = pneg %p139
        $region34: #{_lambda_.2} parent=23 // pred_check_branch
          %295 = sbr.rel (%p293) target = $region36
        $region35: #{_lambda_.2} parent=23 // pred_region
          %s296 = sand.u32 %s129, 1
          %s297 = scalar_lea.sflag [#allocation8], %s296
          %s298 = sand.u32 %s129, 1
          %s299 = smul.addr %s298, 1024
          %s300 = scalar_lea.vmem [#allocation7], %s299
          %s301 = ssub.s32 %s19, 1
          %p302 = scmp.gt.s32.totalorder %s301, 0
          %s303 = scalar_select %p302, %s301, 0
          %s305 = ssub.s32 16384, 16384
          %306 = vsyncadd %s297, %s305
          %s307 = smul.addr %s303, 128
          %s308 = smul.addr %s307, 128
          %s309 = scalar_lea.hbm %s4, %s308
          %s310 = sshll.u32 %s300, 4
          %s311 = int_to_ptr.vmem [resolvable:$true] %s310
          %316 = dma.hbm_to_vmem [thread:$0]  %s309, 16384, %s311, %s297, 512, 512, 32
        $region36: #{_lambda_.2} parent=23 // pred_fallthru
          _
        // Predicated region
        $region37: #{_lambda_.2} parent=23 // pred_check
          %p317 = pneg %p165
        $region38: #{_lambda_.2} parent=23 // pred_check_branch
          %319 = sbr.rel (%p317) target = $region40
        $region39: #{_lambda_.2} parent=23 // pred_region
          %p320 = scmp.lt.s32.totalorder %s19, 1
          %s321 = scalar_select %p320, %s19, 1
          %s322 = smul.addr %s321, 4
          %s323 = scalar_lea.vmem %s5, %s322
        $region40: #{_lambda_.2} parent=23 // pred_fallthru
          _
      $region24: #{_lambda_.2} parent=5 // pred_fallthru
        _
      %p324 = scmp.le.s32.totalorder 1, %s19
      %p325 = scmp.lt.s32.totalorder %s19, 3
      %p326 = pnand %p324, %p325
      %p327 = pneg %p326
      // Predicated region
      $region41: #{_lambda_.2} parent=5 // pred_check
        _
      $region42: #{_lambda_.2} parent=5 // pred_check_branch
        %329 = sbr.rel (%p326) target = $region44
      $region43: #{_lambda_.2} parent=5 // pred_region
        %s330 = ssub.s32 %s19, 1
        // Predicated region
        $region45: #{_lambda_.2} parent=43 // pred_check
          %p331 = pneg %p113
        $region46: #{_lambda_.2} parent=43 // pred_check_branch
          %333 = sbr.rel (%p331) target = $region48
        $region47: #{_lambda_.2} parent=43 // pred_region
          %334 = dma.done [#allocation6], 16384
        $region48: #{_lambda_.2} parent=43 // pred_fallthru
          _
        %s335 = sand.u32 %s132, 1
        %s336 = scalar_lea.sflag [#allocation8], %s335
        %s337 = sand.u32 %s132, 1
        %s338 = smul.addr %s337, 1024
        %s339 = scalar_lea.vmem [#allocation7], %s338
        // Predicated region
        $region49: #{_lambda_.2} parent=43 // pred_check
          %p340 = pneg %p145
        $region50: #{_lambda_.2} parent=43 // pred_check_branch
          %342 = sbr.rel (%p340) target = $region52
        $region51: #{_lambda_.2} parent=43 // pred_region
          %343 = dma.done %s336, 16384
        $region52: #{_lambda_.2} parent=43 // pred_fallthru
          _
        %p344 = pneg %p40
        %p345 = pneg %p37
        %p346 = scmp.lt.s32.totalorder %s24, 1
        %s347 = scalar_select %p346, %s24, 1
        %s348 = smul.addr %s347, 8
        %s349 = scalar_lea.vmem %s1, %s348
        %p350 = pneg %p66
        %p351 = pneg %p63
        %p352 = scmp.lt.s32.totalorder %s24, 1
        %s353 = scalar_select %p352, %s24, 1
        %s354 = smul.addr %s353, 8
        %s355 = scalar_lea.vmem %s2, %s354
        %p356 = pneg %p92
        %p357 = pneg %p89
        %p358 = pneg %p113
        %p359 = pneg %p110
        %s360 = sand.u32 %s132, 1
        %s361 = scalar_lea.sflag [#allocation8], %s360
        %s362 = sand.u32 %s132, 1
        %s363 = smul.addr %s362, 1024
        %s364 = scalar_lea.vmem [#allocation7], %s363
        %p365 = pneg %p145
        %p366 = pneg %p142
        %p367 = scmp.lt.s32.totalorder %s24, 1
        %s368 = scalar_select %p367, %s24, 1
        %s369 = smul.addr %s368, 4
        %s370 = scalar_lea.vmem %s5, %s369
        %p371 = pneg %p171
        %p372 = pneg %p168
        %p373 = pneg %p197
        %p374 = pneg %p194
        %p375 = scmp.lt.s32.totalorder %s24, 1
        %s376 = scalar_select %p375, %s24, 1
        %s377 = smul.addr %s376, 8
        %s378 = scalar_lea.vmem %s6, %s377
        %p379 = pneg %p223
        %p380 = pneg %p220
        %p381 = scmp.lt.s32.totalorder %s24, 1
        %s382 = scalar_select %p381, %s24, 1
        %s383 = smul.addr %s382, 8
        %s384 = scalar_lea.vmem %s7, %s383
        %p385 = pneg %p244
        %p386 = pneg %p241
        %p387 = scmp.lt.s32.totalorder %s24, 1
        %s388 = scalar_select %p387, %s24, 1
        %s389 = smul.addr %s388, 8
        %s390 = scalar_lea.vmem %s1, %s389
        %p391 = scmp.lt.s32.totalorder %s24, 1
        %s392 = scalar_select %p391, %s24, 1
        %s393 = smul.addr %s392, 8
        %s394 = scalar_lea.vmem %s2, %s393
        %s395 = ssub.s32 %s24, 1
        %p396 = scmp.gt.s32.totalorder %s395, 0
        %s397 = scalar_select %p396, %s395, 0
        %p398 = scmp.lt.s32.totalorder %s24, 1
        %s399 = scalar_select %p398, %s24, 1
        %s400 = smul.addr %s399, 4
        %s401 = scalar_lea.vmem %s5, %s400
        %p402 = scmp.lt.s32.totalorder %s24, 1
        %s403 = scalar_select %p402, %s24, 1
        %s404 = smul.addr %s403, 8
        %s405 = scalar_lea.vmem %s6, %s404
        %p406 = scmp.lt.s32.totalorder %s24, 1
        %s407 = scalar_select %p406, %s24, 1
        %s408 = smul.addr %s407, 8
        %s409 = scalar_lea.vmem %s7, %s408
        %v410 = vld [vmem:[%s390] sm:$0xff]
        %v411 = vld [vmem:[%s394] sm:$0xff]
        %p412 = scmp.eq.s32.totalorder %s24, 0
        // Predicated region
        $region53: #{_lambda_.2} parent=43 // pred_check
          %p413 = pneg %p412
        $region54: #{_lambda_.2} parent=43 // pred_check_branch
          %415 = sbr.rel (%p413) target = $region56
        $region55: #{_lambda_.2} parent=43 // pred_region
          %v416 = vld [vmem:[%s0] sm:$0xff]
          %417 = vst [vmem:[#allocation2] sm:$0xff] %v416
          %418 = vst [vmem:[#allocation2 + $0x8] sm:$0xff] %v410
          %v419 = vld [vmem:[#allocation2] sm:$0xff]
          %v420 = vld [vmem:[#allocation2 + $0x8] sm:$0xff]
          %v421 = vld [vmem:[#allocation5] sm:$0xff]
          %v422 = vld [vmem:[#allocation5 + $0x8] sm:$0xff]
          %v423 = vld [vmem:[#allocation5 + $0x10] sm:$0xff]
          %v424 = vld [vmem:[#allocation5 + $0x18] sm:$0xff]
          %v425 = vld [vmem:[#allocation5 + $0x20] sm:$0xff]
          %v426 = vld [vmem:[#allocation5 + $0x28] sm:$0xff]
          %v427 = vld [vmem:[#allocation5 + $0x30] sm:$0xff]
          %v428 = vld [vmem:[#allocation5 + $0x38] sm:$0xff]
          %v429 = vld [vmem:[#allocation5 + $0x40] sm:$0xff]
          %v430 = vld [vmem:[#allocation5 + $0x48] sm:$0xff]
          %v431 = vld [vmem:[#allocation5 + $0x50] sm:$0xff]
          %v432 = vld [vmem:[#allocation5 + $0x58] sm:$0xff]
          %v433 = vld [vmem:[#allocation5 + $0x60] sm:$0xff]
          %v434 = vld [vmem:[#allocation5 + $0x68] sm:$0xff]
          %v435 = vld [vmem:[#allocation5 + $0x70] sm:$0xff]
          %v436 = vld [vmem:[#allocation5 + $0x78] sm:$0xff]
          %v437 = vld [vmem:[#allocation5 + $0x80] sm:$0xff]
          %v438 = vld [vmem:[#allocation5 + $0x88] sm:$0xff]
          %v439 = vld [vmem:[#allocation5 + $0x90] sm:$0xff]
          %v440 = vld [vmem:[#allocation5 + $0x98] sm:$0xff]
          %v441 = vld [vmem:[#allocation5 + $0xa0] sm:$0xff]
          %v442 = vld [vmem:[#allocation5 + $0xa8] sm:$0xff]
          %v443 = vld [vmem:[#allocation5 + $0xb0] sm:$0xff]
          %v444 = vld [vmem:[#allocation5 + $0xb8] sm:$0xff]
          %v445 = vld [vmem:[#allocation5 + $0xc0] sm:$0xff]
          %v446 = vld [vmem:[#allocation5 + $0xc8] sm:$0xff]
          %v447 = vld [vmem:[#allocation5 + $0xd0] sm:$0xff]
          %v448 = vld [vmem:[#allocation5 + $0xd8] sm:$0xff]
          %v449 = vld [vmem:[#allocation5 + $0xe0] sm:$0xff]
          %v450 = vld [vmem:[#allocation5 + $0xe8] sm:$0xff]
          %v451 = vld [vmem:[#allocation5 + $0xf0] sm:$0xff]
          %v452 = vld [vmem:[#allocation5 + $0xf8] sm:$0xff]
          %v453 = vld [vmem:[#allocation5 + $0x100] sm:$0xff]
          %v454 = vld [vmem:[#allocation5 + $0x108] sm:$0xff]
          %v455 = vld [vmem:[#allocation5 + $0x110] sm:$0xff]
          %v456 = vld [vmem:[#allocation5 + $0x118] sm:$0xff]
          %v457 = vld [vmem:[#allocation5 + $0x120] sm:$0xff]
          %v458 = vld [vmem:[#allocation5 + $0x128] sm:$0xff]
          %v459 = vld [vmem:[#allocation5 + $0x130] sm:$0xff]
          %v460 = vld [vmem:[#allocation5 + $0x138] sm:$0xff]
          %v461 = vld [vmem:[#allocation5 + $0x140] sm:$0xff]
          %v462 = vld [vmem:[#allocation5 + $0x148] sm:$0xff]
          %v463 = vld [vmem:[#allocation5 + $0x150] sm:$0xff]
          %v464 = vld [vmem:[#allocation5 + $0x158] sm:$0xff]
          %v465 = vld [vmem:[#allocation5 + $0x160] sm:$0xff]
          %v466 = vld [vmem:[#allocation5 + $0x168] sm:$0xff]
          %v467 = vld [vmem:[#allocation5 + $0x170] sm:$0xff]
          %v468 = vld [vmem:[#allocation5 + $0x178] sm:$0xff]
          %v469 = vld [vmem:[#allocation5 + $0x180] sm:$0xff]
          %v470 = vld [vmem:[#allocation5 + $0x188] sm:$0xff]
          %v471 = vld [vmem:[#allocation5 + $0x190] sm:$0xff]
          %v472 = vld [vmem:[#allocation5 + $0x198] sm:$0xff]
          %v473 = vld [vmem:[#allocation5 + $0x1a0] sm:$0xff]
          %v474 = vld [vmem:[#allocation5 + $0x1a8] sm:$0xff]
          %v475 = vld [vmem:[#allocation5 + $0x1b0] sm:$0xff]
          %v476 = vld [vmem:[#allocation5 + $0x1b8] sm:$0xff]
          %v477 = vld [vmem:[#allocation5 + $0x1c0] sm:$0xff]
          %v478 = vld [vmem:[#allocation5 + $0x1c8] sm:$0xff]
          %v479 = vld [vmem:[#allocation5 + $0x1d0] sm:$0xff]
          %v480 = vld [vmem:[#allocation5 + $0x1d8] sm:$0xff]
          %v481 = vld [vmem:[#allocation5 + $0x1e0] sm:$0xff]
          %v482 = vld [vmem:[#allocation5 + $0x1e8] sm:$0xff]
          %v483 = vld [vmem:[#allocation5 + $0x1f0] sm:$0xff]
          %v484 = vld [vmem:[#allocation5 + $0x1f8] sm:$0xff]
          %v485 = vld [vmem:[#allocation5 + $0x200] sm:$0xff]
          %v486 = vld [vmem:[#allocation5 + $0x208] sm:$0xff]
          %v487 = vld [vmem:[#allocation5 + $0x210] sm:$0xff]
          %v488 = vld [vmem:[#allocation5 + $0x218] sm:$0xff]
          %v489 = vld [vmem:[#allocation5 + $0x220] sm:$0xff]
          %v490 = vld [vmem:[#allocation5 + $0x228] sm:$0xff]
          %v491 = vld [vmem:[#allocation5 + $0x230] sm:$0xff]
          %v492 = vld [vmem:[#allocation5 + $0x238] sm:$0xff]
          %v493 = vld [vmem:[#allocation5 + $0x240] sm:$0xff]
          %v494 = vld [vmem:[#allocation5 + $0x248] sm:$0xff]
          %v495 = vld [vmem:[#allocation5 + $0x250] sm:$0xff]
          %v496 = vld [vmem:[#allocation5 + $0x258] sm:$0xff]
          %v497 = vld [vmem:[#allocation5 + $0x260] sm:$0xff]
          %v498 = vld [vmem:[#allocation5 + $0x268] sm:$0xff]
          %v499 = vld [vmem:[#allocation5 + $0x270] sm:$0xff]
          %v500 = vld [vmem:[#allocation5 + $0x278] sm:$0xff]
          %v501 = vld [vmem:[#allocation5 + $0x280] sm:$0xff]
          %v502 = vld [vmem:[#allocation5 + $0x288] sm:$0xff]
          %v503 = vld [vmem:[#allocation5 + $0x290] sm:$0xff]
          %v504 = vld [vmem:[#allocation5 + $0x298] sm:$0xff]
          %v505 = vld [vmem:[#allocation5 + $0x2a0] sm:$0xff]
          %v506 = vld [vmem:[#allocation5 + $0x2a8] sm:$0xff]
          %v507 = vld [vmem:[#allocation5 + $0x2b0] sm:$0xff]
          %v508 = vld [vmem:[#allocation5 + $0x2b8] sm:$0xff]
          %v509 = vld [vmem:[#allocation5 + $0x2c0] sm:$0xff]
          %v510 = vld [vmem:[#allocation5 + $0x2c8] sm:$0xff]
          %v511 = vld [vmem:[#allocation5 + $0x2d0] sm:$0xff]
          %v512 = vld [vmem:[#allocation5 + $0x2d8] sm:$0xff]
          %v513 = vld [vmem:[#allocation5 + $0x2e0] sm:$0xff]
          %v514 = vld [vmem:[#allocation5 + $0x2e8] sm:$0xff]
          %v515 = vld [vmem:[#allocation5 + $0x2f0] sm:$0xff]
          %v516 = vld [vmem:[#allocation5 + $0x2f8] sm:$0xff]
          %v517 = vld [vmem:[#allocation5 + $0x300] sm:$0xff]
          %v518 = vld [vmem:[#allocation5 + $0x308] sm:$0xff]
          %v519 = vld [vmem:[#allocation5 + $0x310] sm:$0xff]
          %v520 = vld [vmem:[#allocation5 + $0x318] sm:$0xff]
          %v521 = vld [vmem:[#allocation5 + $0x320] sm:$0xff]
          %v522 = vld [vmem:[#allocation5 + $0x328] sm:$0xff]
          %v523 = vld [vmem:[#allocation5 + $0x330] sm:$0xff]
          %v524 = vld [vmem:[#allocation5 + $0x338] sm:$0xff]
          %v525 = vld [vmem:[#allocation5 + $0x340] sm:$0xff]
          %v526 = vld [vmem:[#allocation5 + $0x348] sm:$0xff]
          %v527 = vld [vmem:[#allocation5 + $0x350] sm:$0xff]
          %v528 = vld [vmem:[#allocation5 + $0x358] sm:$0xff]
          %v529 = vld [vmem:[#allocation5 + $0x360] sm:$0xff]
          %v530 = vld [vmem:[#allocation5 + $0x368] sm:$0xff]
          %v531 = vld [vmem:[#allocation5 + $0x370] sm:$0xff]
          %v532 = vld [vmem:[#allocation5 + $0x378] sm:$0xff]
          %v533 = vld [vmem:[#allocation5 + $0x380] sm:$0xff]
          %v534 = vld [vmem:[#allocation5 + $0x388] sm:$0xff]
          %v535 = vld [vmem:[#allocation5 + $0x390] sm:$0xff]
          %v536 = vld [vmem:[#allocation5 + $0x398] sm:$0xff]
          %v537 = vld [vmem:[#allocation5 + $0x3a0] sm:$0xff]
          %v538 = vld [vmem:[#allocation5 + $0x3a8] sm:$0xff]
          %v539 = vld [vmem:[#allocation5 + $0x3b0] sm:$0xff]
          %v540 = vld [vmem:[#allocation5 + $0x3b8] sm:$0xff]
          %v541 = vld [vmem:[#allocation5 + $0x3c0] sm:$0xff]
          %v542 = vld [vmem:[#allocation5 + $0x3c8] sm:$0xff]
          %v543 = vld [vmem:[#allocation5 + $0x3d0] sm:$0xff]
          %v544 = vld [vmem:[#allocation5 + $0x3d8] sm:$0xff]
          %v545 = vld [vmem:[#allocation5 + $0x3e0] sm:$0xff]
          %v546 = vld [vmem:[#allocation5 + $0x3e8] sm:$0xff]
          %v547 = vld [vmem:[#allocation5 + $0x3f0] sm:$0xff]
          %v548 = vld [vmem:[#allocation5 + $0x3f8] sm:$0xff]
          %549 = vmatprep.subr.mxu0 %v482
          %550 = vmatpush1.msra.mxu0 %v481
          %551 = vmatprep.subr.mxu0 %v478
          %552 = vmatpush1.msra.mxu0 %v477
          %553 = vmatprep.subr.mxu0 %v474
          %554 = vmatpush1.msra.mxu0 %v473
          %555 = vmatprep.subr.mxu0 %v470
          %556 = vmatpush1.msra.mxu0 %v469
          %557 = vmatprep.subr.mxu0 %v466
          %558 = vmatpush1.msra.mxu0 %v465
          %559 = vmatprep.subr.mxu0 %v462
          %560 = vmatpush1.msra.mxu0 %v461
          %561 = vmatprep.subr.mxu0 %v458
          %562 = vmatpush1.msra.mxu0 %v457
          %563 = vmatprep.subr.mxu0 %v454
          %564 = vmatpush1.msra.mxu0 %v453
          %565 = vmatprep.subr.mxu0 %v450
          %566 = vmatpush1.msra.mxu0 %v449
          %567 = vmatprep.subr.mxu0 %v446
          %568 = vmatpush1.msra.mxu0 %v445
          %569 = vmatprep.subr.mxu0 %v442
          %570 = vmatpush1.msra.mxu0 %v441
          %571 = vmatprep.subr.mxu0 %v438
          %572 = vmatpush1.msra.mxu0 %v437
          %573 = vmatprep.subr.mxu0 %v434
          %574 = vmatpush1.msra.mxu0 %v433
          %575 = vmatprep.subr.mxu0 %v430
          %576 = vmatpush1.msra.mxu0 %v429
          %577 = vmatprep.subr.mxu0 %v426
          %578 = vmatpush1.msra.mxu0 %v425
          %579 = vmatprep.subr.mxu0 %v422
          %580 = vmatpush1.msra.mxu0 %v421
          %581 = vmatprep.subr.mxu0 %v546
          %582 = vmatpush2.msra.mxu0 %v545
          %583 = vmatprep.subr.mxu0 %v542
          %584 = vmatpush2.msra.mxu0 %v541
          %585 = vmatprep.subr.mxu0 %v538
          %586 = vmatpush2.msra.mxu0 %v537
          %587 = vmatprep.subr.mxu0 %v534
          %588 = vmatpush2.msra.mxu0 %v533
          %589 = vmatprep.subr.mxu0 %v530
          %590 = vmatpush2.msra.mxu0 %v529
          %591 = vmatprep.subr.mxu0 %v526
          %592 = vmatpush2.msra.mxu0 %v525
          %593 = vmatprep.subr.mxu0 %v522
          %594 = vmatpush2.msra.mxu0 %v521
          %595 = vmatprep.subr.mxu0 %v518
          %596 = vmatpush2.msra.mxu0 %v517
          %597 = vmatprep.subr.mxu0 %v514
          %598 = vmatpush2.msra.mxu0 %v513
          %599 = vmatprep.subr.mxu0 %v510
          %600 = vmatpush2.msra.mxu0 %v509
          %601 = vmatprep.subr.mxu0 %v506
          %602 = vmatpush2.msra.mxu0 %v505
          %603 = vmatprep.subr.mxu0 %v502
          %604 = vmatpush2.msra.mxu0 %v501
          %605 = vmatprep.subr.mxu0 %v498
          %606 = vmatpush2.msra.mxu0 %v497
          %607 = vmatprep.subr.mxu0 %v494
          %608 = vmatpush2.msra.mxu0 %v493
          %609 = vmatprep.subr.mxu0 %v490
          %610 = vmatpush2.msra.mxu0 %v489
          %611 = vmatprep.subr.mxu0 %v486
          %612 = vmatpush2.msra.mxu0 %v485
          %613 = vmatprep.mubr.f32.mxu0 %v420
          %614 = vmatmul.mubr.f32.gmra.mxu0 %v419
          %v615 = vpop.f32.mrf.mxu0
          %v616 = vadd.f32 0.0, %v615
          %v617 = vpop.f32.mrf.mxu0
          %v618 = vadd.f32 0.0, %v617
          %619 = vdwg.mxu0
          %620 = vmatprep.subr.mxu0 %v484
          %621 = vmatpush1.msra.mxu0 %v483
          %622 = vmatprep.subr.mxu0 %v480
          %623 = vmatpush1.msra.mxu0 %v479
          %624 = vmatprep.subr.mxu0 %v476
          %625 = vmatpush1.msra.mxu0 %v475
          %626 = vmatprep.subr.mxu0 %v472
          %627 = vmatpush1.msra.mxu0 %v471
          %628 = vmatprep.subr.mxu0 %v468
          %629 = vmatpush1.msra.mxu0 %v467
          %630 = vmatprep.subr.mxu0 %v464
          %631 = vmatpush1.msra.mxu0 %v463
          %632 = vmatprep.subr.mxu0 %v460
          %633 = vmatpush1.msra.mxu0 %v459
          %634 = vmatprep.subr.mxu0 %v456
          %635 = vmatpush1.msra.mxu0 %v455
          %636 = vmatprep.subr.mxu0 %v452
          %637 = vmatpush1.msra.mxu0 %v451
          %638 = vmatprep.subr.mxu0 %v448
          %639 = vmatpush1.msra.mxu0 %v447
          %640 = vmatprep.subr.mxu0 %v444
          %641 = vmatpush1.msra.mxu0 %v443
          %642 = vmatprep.subr.mxu0 %v440
          %643 = vmatpush1.msra.mxu0 %v439
          %644 = vmatprep.subr.mxu0 %v436
          %645 = vmatpush1.msra.mxu0 %v435
          %646 = vmatprep.subr.mxu0 %v432
          %647 = vmatpush1.msra.mxu0 %v431
          %648 = vmatprep.subr.mxu0 %v428
          %649 = vmatpush1.msra.mxu0 %v427
          %650 = vmatprep.subr.mxu0 %v424
          %651 = vmatpush1.msra.mxu0 %v423
          %652 = vmatprep.subr.mxu0 %v548
          %653 = vmatpush2.msra.mxu0 %v547
          %654 = vmatprep.subr.mxu0 %v544
          %655 = vmatpush2.msra.mxu0 %v543
          %656 = vmatprep.subr.mxu0 %v540
          %657 = vmatpush2.msra.mxu0 %v539
          %658 = vmatprep.subr.mxu0 %v536
          %659 = vmatpush2.msra.mxu0 %v535
          %660 = vmatprep.subr.mxu0 %v532
          %661 = vmatpush2.msra.mxu0 %v531
          %662 = vmatprep.subr.mxu0 %v528
          %663 = vmatpush2.msra.mxu0 %v527
          %664 = vmatprep.subr.mxu0 %v524
          %665 = vmatpush2.msra.mxu0 %v523
          %666 = vmatprep.subr.mxu0 %v520
          %667 = vmatpush2.msra.mxu0 %v519
          %668 = vmatprep.subr.mxu0 %v516
          %669 = vmatpush2.msra.mxu0 %v515
          %670 = vmatprep.subr.mxu0 %v512
          %671 = vmatpush2.msra.mxu0 %v511
          %672 = vmatprep.subr.mxu0 %v508
          %673 = vmatpush2.msra.mxu0 %v507
          %674 = vmatprep.subr.mxu0 %v504
          %675 = vmatpush2.msra.mxu0 %v503
          %676 = vmatprep.subr.mxu0 %v500
          %677 = vmatpush2.msra.mxu0 %v499
          %678 = vmatprep.subr.mxu0 %v496
          %679 = vmatpush2.msra.mxu0 %v495
          %680 = vmatprep.subr.mxu0 %v492
          %681 = vmatpush2.msra.mxu0 %v491
          %682 = vmatprep.subr.mxu0 %v488
          %683 = vmatpush2.msra.mxu0 %v487
          %684 = vmatprep.mubr.f32.mxu0 %v420
          %685 = vmatmul.mubr.f32.gmra.mxu0 %v419
          %v686 = vpop.f32.mrf.mxu0
          %v687 = vadd.f32 0.0, %v686
          %v688 = vpop.f32.mrf.mxu0
          %v689 = vadd.f32 0.0, %v688
          %690 = vdwg.mxu0
          %691 = vst [vmem:[#allocation4] sm:$0xff] %v616
          %692 = vst [vmem:[#allocation4 + $0x8] sm:$0xff] %v618
          %693 = vst [vmem:[#allocation4 + $0x10] sm:$0xff] %v687
          %694 = vst [vmem:[#allocation4 + $0x18] sm:$0xff] %v689
        $region56: #{_lambda_.2} parent=43 // pred_fallthru
          _
        %p695 = scmp.gt.s32.totalorder %s24, 0
        // Predicated region
        $region57: #{_lambda_.2} parent=43 // pred_check
          %p696 = pneg %p695
        $region58: #{_lambda_.2} parent=43 // pred_check_branch
          %698 = sbr.rel (%p696) target = $region60
        $region59: #{_lambda_.2} parent=43 // pred_region
          %699 = vst [vmem:[#allocation3 + $0x8] sm:$0xff] %v410
          %v700 = vld [vmem:[#allocation3] sm:$0xff]
          %v701 = vld [vmem:[#allocation3 + $0x8] sm:$0xff]
          %v702 = vld [vmem:[%s339] sm:$0xff]
          %v703 = vld [vmem:[%s339 + $0x8] sm:$0xff]
          %v704 = vld [vmem:[%s339 + $0x10] sm:$0xff]
          %v705 = vld [vmem:[%s339 + $0x18] sm:$0xff]
          %v706 = vld [vmem:[%s339 + $0x20] sm:$0xff]
          %v707 = vld [vmem:[%s339 + $0x28] sm:$0xff]
          %v708 = vld [vmem:[%s339 + $0x30] sm:$0xff]
          %v709 = vld [vmem:[%s339 + $0x38] sm:$0xff]
          %v710 = vld [vmem:[%s339 + $0x40] sm:$0xff]
          %v711 = vld [vmem:[%s339 + $0x48] sm:$0xff]
          %v712 = vld [vmem:[%s339 + $0x50] sm:$0xff]
          %v713 = vld [vmem:[%s339 + $0x58] sm:$0xff]
          %v714 = vld [vmem:[%s339 + $0x60] sm:$0xff]
          %v715 = vld [vmem:[%s339 + $0x68] sm:$0xff]
          %v716 = vld [vmem:[%s339 + $0x70] sm:$0xff]
          %v717 = vld [vmem:[%s339 + $0x78] sm:$0xff]
          %v718 = vld [vmem:[%s339 + $0x80] sm:$0xff]
          %v719 = vld [vmem:[%s339 + $0x88] sm:$0xff]
          %v720 = vld [vmem:[%s339 + $0x90] sm:$0xff]
          %v721 = vld [vmem:[%s339 + $0x98] sm:$0xff]
          %v722 = vld [vmem:[%s339 + $0xa0] sm:$0xff]
          %v723 = vld [vmem:[%s339 + $0xa8] sm:$0xff]
          %v724 = vld [vmem:[%s339 + $0xb0] sm:$0xff]
          %v725 = vld [vmem:[%s339 + $0xb8] sm:$0xff]
          %v726 = vld [vmem:[%s339 + $0xc0] sm:$0xff]
          %v727 = vld [vmem:[%s339 + $0xc8] sm:$0xff]
          %v728 = vld [vmem:[%s339 + $0xd0] sm:$0xff]
          %v729 = vld [vmem:[%s339 + $0xd8] sm:$0xff]
          %v730 = vld [vmem:[%s339 + $0xe0] sm:$0xff]
          %v731 = vld [vmem:[%s339 + $0xe8] sm:$0xff]
          %v732 = vld [vmem:[%s339 + $0xf0] sm:$0xff]
          %v733 = vld [vmem:[%s339 + $0xf8] sm:$0xff]
          %v734 = vld [vmem:[%s339 + $0x100] sm:$0xff]
          %v735 = vld [vmem:[%s339 + $0x108] sm:$0xff]
          %v736 = vld [vmem:[%s339 + $0x110] sm:$0xff]
          %v737 = vld [vmem:[%s339 + $0x118] sm:$0xff]
          %v738 = vld [vmem:[%s339 + $0x120] sm:$0xff]
          %v739 = vld [vmem:[%s339 + $0x128] sm:$0xff]
          %v740 = vld [vmem:[%s339 + $0x130] sm:$0xff]
          %v741 = vld [vmem:[%s339 + $0x138] sm:$0xff]
          %v742 = vld [vmem:[%s339 + $0x140] sm:$0xff]
          %v743 = vld [vmem:[%s339 + $0x148] sm:$0xff]
          %v744 = vld [vmem:[%s339 + $0x150] sm:$0xff]
          %v745 = vld [vmem:[%s339 + $0x158] sm:$0xff]
          %v746 = vld [vmem:[%s339 + $0x160] sm:$0xff]
          %v747 = vld [vmem:[%s339 + $0x168] sm:$0xff]
          %v748 = vld [vmem:[%s339 + $0x170] sm:$0xff]
          %v749 = vld [vmem:[%s339 + $0x178] sm:$0xff]
          %v750 = vld [vmem:[%s339 + $0x180] sm:$0xff]
          %v751 = vld [vmem:[%s339 + $0x188] sm:$0xff]
          %v752 = vld [vmem:[%s339 + $0x190] sm:$0xff]
          %v753 = vld [vmem:[%s339 + $0x198] sm:$0xff]
          %v754 = vld [vmem:[%s339 + $0x1a0] sm:$0xff]
          %v755 = vld [vmem:[%s339 + $0x1a8] sm:$0xff]
          %v756 = vld [vmem:[%s339 + $0x1b0] sm:$0xff]
          %v757 = vld [vmem:[%s339 + $0x1b8] sm:$0xff]
          %v758 = vld [vmem:[%s339 + $0x1c0] sm:$0xff]
          %v759 = vld [vmem:[%s339 + $0x1c8] sm:$0xff]
          %v760 = vld [vmem:[%s339 + $0x1d0] sm:$0xff]
          %v761 = vld [vmem:[%s339 + $0x1d8] sm:$0xff]
          %v762 = vld [vmem:[%s339 + $0x1e0] sm:$0xff]
          %v763 = vld [vmem:[%s339 + $0x1e8] sm:$0xff]
          %v764 = vld [vmem:[%s339 + $0x1f0] sm:$0xff]
          %v765 = vld [vmem:[%s339 + $0x1f8] sm:$0xff]
          %v766 = vld [vmem:[%s339 + $0x200] sm:$0xff]
          %v767 = vld [vmem:[%s339 + $0x208] sm:$0xff]
          %v768 = vld [vmem:[%s339 + $0x210] sm:$0xff]
          %v769 = vld [vmem:[%s339 + $0x218] sm:$0xff]
          %v770 = vld [vmem:[%s339 + $0x220] sm:$0xff]
          %v771 = vld [vmem:[%s339 + $0x228] sm:$0xff]
          %v772 = vld [vmem:[%s339 + $0x230] sm:$0xff]
          %v773 = vld [vmem:[%s339 + $0x238] sm:$0xff]
          %v774 = vld [vmem:[%s339 + $0x240] sm:$0xff]
          %v775 = vld [vmem:[%s339 + $0x248] sm:$0xff]
          %v776 = vld [vmem:[%s339 + $0x250] sm:$0xff]
          %v777 = vld [vmem:[%s339 + $0x258] sm:$0xff]
          %v778 = vld [vmem:[%s339 + $0x260] sm:$0xff]
          %v779 = vld [vmem:[%s339 + $0x268] sm:$0xff]
          %v780 = vld [vmem:[%s339 + $0x270] sm:$0xff]
          %v781 = vld [vmem:[%s339 + $0x278] sm:$0xff]
          %v782 = vld [vmem:[%s339 + $0x280] sm:$0xff]
          %v783 = vld [vmem:[%s339 + $0x288] sm:$0xff]
          %v784 = vld [vmem:[%s339 + $0x290] sm:$0xff]
          %v785 = vld [vmem:[%s339 + $0x298] sm:$0xff]
          %v786 = vld [vmem:[%s339 + $0x2a0] sm:$0xff]
          %v787 = vld [vmem:[%s339 + $0x2a8] sm:$0xff]
          %v788 = vld [vmem:[%s339 + $0x2b0] sm:$0xff]
          %v789 = vld [vmem:[%s339 + $0x2b8] sm:$0xff]
          %v790 = vld [vmem:[%s339 + $0x2c0] sm:$0xff]
          %v791 = vld [vmem:[%s339 + $0x2c8] sm:$0xff]
          %v792 = vld [vmem:[%s339 + $0x2d0] sm:$0xff]
          %v793 = vld [vmem:[%s339 + $0x2d8] sm:$0xff]
          %v794 = vld [vmem:[%s339 + $0x2e0] sm:$0xff]
          %v795 = vld [vmem:[%s339 + $0x2e8] sm:$0xff]
          %v796 = vld [vmem:[%s339 + $0x2f0] sm:$0xff]
          %v797 = vld [vmem:[%s339 + $0x2f8] sm:$0xff]
          %v798 = vld [vmem:[%s339 + $0x300] sm:$0xff]
          %v799 = vld [vmem:[%s339 + $0x308] sm:$0xff]
          %v800 = vld [vmem:[%s339 + $0x310] sm:$0xff]
          %v801 = vld [vmem:[%s339 + $0x318] sm:$0xff]
          %v802 = vld [vmem:[%s339 + $0x320] sm:$0xff]
          %v803 = vld [vmem:[%s339 + $0x328] sm:$0xff]
          %v804 = vld [vmem:[%s339 + $0x330] sm:$0xff]
          %v805 = vld [vmem:[%s339 + $0x338] sm:$0xff]
          %v806 = vld [vmem:[%s339 + $0x340] sm:$0xff]
          %v807 = vld [vmem:[%s339 + $0x348] sm:$0xff]
          %v808 = vld [vmem:[%s339 + $0x350] sm:$0xff]
          %v809 = vld [vmem:[%s339 + $0x358] sm:$0xff]
          %v810 = vld [vmem:[%s339 + $0x360] sm:$0xff]
          %v811 = vld [vmem:[%s339 + $0x368] sm:$0xff]
          %v812 = vld [vmem:[%s339 + $0x370] sm:$0xff]
          %v813 = vld [vmem:[%s339 + $0x378] sm:$0xff]
          %v814 = vld [vmem:[%s339 + $0x380] sm:$0xff]
          %v815 = vld [vmem:[%s339 + $0x388] sm:$0xff]
          %v816 = vld [vmem:[%s339 + $0x390] sm:$0xff]
          %v817 = vld [vmem:[%s339 + $0x398] sm:$0xff]
          %v818 = vld [vmem:[%s339 + $0x3a0] sm:$0xff]
          %v819 = vld [vmem:[%s339 + $0x3a8] sm:$0xff]
          %v820 = vld [vmem:[%s339 + $0x3b0] sm:$0xff]
          %v821 = vld [vmem:[%s339 + $0x3b8] sm:$0xff]
          %v822 = vld [vmem:[%s339 + $0x3c0] sm:$0xff]
          %v823 = vld [vmem:[%s339 + $0x3c8] sm:$0xff]
          %v824 = vld [vmem:[%s339 + $0x3d0] sm:$0xff]
          %v825 = vld [vmem:[%s339 + $0x3d8] sm:$0xff]
          %v826 = vld [vmem:[%s339 + $0x3e0] sm:$0xff]
          %v827 = vld [vmem:[%s339 + $0x3e8] sm:$0xff]
          %v828 = vld [vmem:[%s339 + $0x3f0] sm:$0xff]
          %v829 = vld [vmem:[%s339 + $0x3f8] sm:$0xff]
          %830 = vmatprep.subr.mxu0 %v763
          %831 = vmatpush1.msra.mxu0 %v762
          %832 = vmatprep.subr.mxu0 %v759
          %833 = vmatpush1.msra.mxu0 %v758
          %834 = vmatprep.subr.mxu0 %v755
          %835 = vmatpush1.msra.mxu0 %v754
          %836 = vmatprep.subr.mxu0 %v751
          %837 = vmatpush1.msra.mxu0 %v750
          %838 = vmatprep.subr.mxu0 %v747
          %839 = vmatpush1.msra.mxu0 %v746
          %840 = vmatprep.subr.mxu0 %v743
          %841 = vmatpush1.msra.mxu0 %v742
          %842 = vmatprep.subr.mxu0 %v739
          %843 = vmatpush1.msra.mxu0 %v738
          %844 = vmatprep.subr.mxu0 %v735
          %845 = vmatpush1.msra.mxu0 %v734
          %846 = vmatprep.subr.mxu0 %v731
          %847 = vmatpush1.msra.mxu0 %v730
          %848 = vmatprep.subr.mxu0 %v727
          %849 = vmatpush1.msra.mxu0 %v726
          %850 = vmatprep.subr.mxu0 %v723
          %851 = vmatpush1.msra.mxu0 %v722
          %852 = vmatprep.subr.mxu0 %v719
          %853 = vmatpush1.msra.mxu0 %v718
          %854 = vmatprep.subr.mxu0 %v715
          %855 = vmatpush1.msra.mxu0 %v714
          %856 = vmatprep.subr.mxu0 %v711
          %857 = vmatpush1.msra.mxu0 %v710
          %858 = vmatprep.subr.mxu0 %v707
          %859 = vmatpush1.msra.mxu0 %v706
          %860 = vmatprep.subr.mxu0 %v703
          %861 = vmatpush1.msra.mxu0 %v702
          %862 = vmatprep.subr.mxu0 %v827
          %863 = vmatpush2.msra.mxu0 %v826
          %864 = vmatprep.subr.mxu0 %v823
          %865 = vmatpush2.msra.mxu0 %v822
          %866 = vmatprep.subr.mxu0 %v819
          %867 = vmatpush2.msra.mxu0 %v818
          %868 = vmatprep.subr.mxu0 %v815
          %869 = vmatpush2.msra.mxu0 %v814
          %870 = vmatprep.subr.mxu0 %v811
          %871 = vmatpush2.msra.mxu0 %v810
          %872 = vmatprep.subr.mxu0 %v807
          %873 = vmatpush2.msra.mxu0 %v806
          %874 = vmatprep.subr.mxu0 %v803
          %875 = vmatpush2.msra.mxu0 %v802
          %876 = vmatprep.subr.mxu0 %v799
          %877 = vmatpush2.msra.mxu0 %v798
          %878 = vmatprep.subr.mxu0 %v795
          %879 = vmatpush2.msra.mxu0 %v794
          %880 = vmatprep.subr.mxu0 %v791
          %881 = vmatpush2.msra.mxu0 %v790
          %882 = vmatprep.subr.mxu0 %v787
          %883 = vmatpush2.msra.mxu0 %v786
          %884 = vmatprep.subr.mxu0 %v783
          %885 = vmatpush2.msra.mxu0 %v782
          %886 = vmatprep.subr.mxu0 %v779
          %887 = vmatpush2.msra.mxu0 %v778
          %888 = vmatprep.subr.mxu0 %v775
          %889 = vmatpush2.msra.mxu0 %v774
          %890 = vmatprep.subr.mxu0 %v771
          %891 = vmatpush2.msra.mxu0 %v770
          %892 = vmatprep.subr.mxu0 %v767
          %893 = vmatpush2.msra.mxu0 %v766
          %894 = vmatprep.mubr.f32.mxu0 %v701
          %895 = vmatmul.mubr.f32.gmra.mxu0 %v700
          %v896 = vpop.f32.mrf.mxu0
          %v897 = vadd.f32 0.0, %v896
          %v898 = vpop.f32.mrf.mxu0
          %v899 = vadd.f32 0.0, %v898
          %900 = vdwg.mxu0
          %901 = vmatprep.subr.mxu0 %v765
          %902 = vmatpush1.msra.mxu0 %v764
          %903 = vmatprep.subr.mxu0 %v761
          %904 = vmatpush1.msra.mxu0 %v760
          %905 = vmatprep.subr.mxu0 %v757
          %906 = vmatpush1.msra.mxu0 %v756
          %907 = vmatprep.subr.mxu0 %v753
          %908 = vmatpush1.msra.mxu0 %v752
          %909 = vmatprep.subr.mxu0 %v749
          %910 = vmatpush1.msra.mxu0 %v748
          %911 = vmatprep.subr.mxu0 %v745
          %912 = vmatpush1.msra.mxu0 %v744
          %913 = vmatprep.subr.mxu0 %v741
          %914 = vmatpush1.msra.mxu0 %v740
          %915 = vmatprep.subr.mxu0 %v737
          %916 = vmatpush1.msra.mxu0 %v736
          %917 = vmatprep.subr.mxu0 %v733
          %918 = vmatpush1.msra.mxu0 %v732
          %919 = vmatprep.subr.mxu0 %v729
          %920 = vmatpush1.msra.mxu0 %v728
          %921 = vmatprep.subr.mxu0 %v725
          %922 = vmatpush1.msra.mxu0 %v724
          %923 = vmatprep.subr.mxu0 %v721
          %924 = vmatpush1.msra.mxu0 %v720
          %925 = vmatprep.subr.mxu0 %v717
          %926 = vmatpush1.msra.mxu0 %v716
          %927 = vmatprep.subr.mxu0 %v713
          %928 = vmatpush1.msra.mxu0 %v712
          %929 = vmatprep.subr.mxu0 %v709
          %930 = vmatpush1.msra.mxu0 %v708
          %931 = vmatprep.subr.mxu0 %v705
          %932 = vmatpush1.msra.mxu0 %v704
          %933 = vmatprep.subr.mxu0 %v829
          %934 = vmatpush2.msra.mxu0 %v828
          %935 = vmatprep.subr.mxu0 %v825
          %936 = vmatpush2.msra.mxu0 %v824
          %937 = vmatprep.subr.mxu0 %v821
          %938 = vmatpush2.msra.mxu0 %v820
          %939 = vmatprep.subr.mxu0 %v817
          %940 = vmatpush2.msra.mxu0 %v816
          %941 = vmatprep.subr.mxu0 %v813
          %942 = vmatpush2.msra.mxu0 %v812
          %943 = vmatprep.subr.mxu0 %v809
          %944 = vmatpush2.msra.mxu0 %v808
          %945 = vmatprep.subr.mxu0 %v805
          %946 = vmatpush2.msra.mxu0 %v804
          %947 = vmatprep.subr.mxu0 %v801
          %948 = vmatpush2.msra.mxu0 %v800
          %949 = vmatprep.subr.mxu0 %v797
          %950 = vmatpush2.msra.mxu0 %v796
          %951 = vmatprep.subr.mxu0 %v793
          %952 = vmatpush2.msra.mxu0 %v792
          %953 = vmatprep.subr.mxu0 %v789
          %954 = vmatpush2.msra.mxu0 %v788
          %955 = vmatprep.subr.mxu0 %v785
          %956 = vmatpush2.msra.mxu0 %v784
          %957 = vmatprep.subr.mxu0 %v781
          %958 = vmatpush2.msra.mxu0 %v780
          %959 = vmatprep.subr.mxu0 %v777
          %960 = vmatpush2.msra.mxu0 %v776
          %961 = vmatprep.subr.mxu0 %v773
          %962 = vmatpush2.msra.mxu0 %v772
          %963 = vmatprep.subr.mxu0 %v769
          %964 = vmatpush2.msra.mxu0 %v768
          %965 = vmatprep.mubr.f32.mxu0 %v701
          %966 = vmatmul.mubr.f32.gmra.mxu0 %v700
          %v967 = vpop.f32.mrf.mxu0
          %v968 = vadd.f32 0.0, %v967
          %v969 = vpop.f32.mrf.mxu0
          %v970 = vadd.f32 0.0, %v969
          %971 = vdwg.mxu0
          %972 = vst [vmem:[#allocation4] sm:$0xff] %v897
          %973 = vst [vmem:[#allocation4 + $0x8] sm:$0xff] %v899
          %974 = vst [vmem:[#allocation4 + $0x10] sm:$0xff] %v968
          %975 = vst [vmem:[#allocation4 + $0x18] sm:$0xff] %v970
        $region60: #{_lambda_.2} parent=43 // pred_fallthru
          _
        %v976 = vld [vmem:[#allocation4] sm:$0xff]
        %v977 = vld [vmem:[#allocation4 + $0x8] sm:$0xff]
        %v978 = vld [vmem:[#allocation4 + $0x10] sm:$0xff]
        %v979 = vld [vmem:[#allocation4 + $0x18] sm:$0xff]
        %v980 = vld [vmem:[%s401] sm:$0xf]
        %v982 = vlaneseq
        %v983 = vshrl.u32 %v982, 7
        %v984 = vsub.s32 0, %v983
        %v985 = vrot.slane %v980, %v984
        %v986 = vlaneseq
        %v987 = vshrl.u32 %v986, 7
        %v988 = vsub.s32 1, %v987
        %v989 = vrot.slane %v980, %v988
        %v990 = vlaneseq
        %v991 = vshrl.u32 %v990, 7
        %v992 = vsub.s32 2, %v991
        %v993 = vrot.slane %v980, %v992
        %v994 = vlaneseq
        %v995 = vshrl.u32 %v994, 7
        %v996 = vsub.s32 3, %v995
        %v997 = vrot.slane %v980, %v996
        %v1002 = vadd.f32 %v976, %v985
        %v1003 = vadd.f32 %v977, %v989
        %v1004 = vadd.f32 %v978, %v993
        %v1005 = vadd.f32 %v979, %v997
        %v1006 = vxor.u32 %v1002, 2147483648
        %v1007 = vmul.f32 %v1006, 1.442695
        %v1008 = vpow.pop %v1007
        %v1009 = vadd.f32 %v1008, 1.0
        %v1010 = vrcp.pop %v1009
        %v1011 = vmul.f32 1.0, %v1010
        %v1012 = vxor.u32 %v1003, 2147483648
        %v1013 = vmul.f32 %v1012, 1.442695
        %v1014 = vpow.pop %v1013
        %v1015 = vadd.f32 %v1014, 1.0
        %v1016 = vrcp.pop %v1015
        %v1017 = vmul.f32 1.0, %v1016
        %v1018 = vtanh.pop %v1004
        %v1019 = vxor.u32 %v1005, 2147483648
        %v1020 = vmul.f32 %v1019, 1.442695
        %v1021 = vpow.pop %v1020
        %v1022 = vadd.f32 %v1021, 1.0
        %v1023 = vrcp.pop %v1022
        %v1024 = vmul.f32 1.0, %v1023
        %v1025 = vmul.f32 %v1017, %v411
        %v1026 = vmul.f32 %v1011, %v1018
        %v1027 = vadd.f32 %v1025, %v1026
        %v1028 = vtanh.pop %v1027
        %v1029 = vmul.f32 %v1024, %v1028
        %1030 = vst [vmem:[%s405] sm:$0xff] %v1029
        %1031 = vst [vmem:[%s409] sm:$0xff] %v1027
        %1032 = vst [vmem:[#allocation3] sm:$0xff] %v1029
        %p1033 = scmp.eq.s32.totalorder %s24, 1
        // Predicated region
        $region61: #{_lambda_.2} parent=43 // pred_check
          %p1034 = pneg %p1033
        $region62: #{_lambda_.2} parent=43 // pred_check_branch
          %1036 = sbr.rel (%p1034) target = $region64
        $region63: #{_lambda_.2} parent=43 // pred_region
          %1037 = vst [vmem:[%s8] sm:$0xff] %v1029
        $region64: #{_lambda_.2} parent=43 // pred_fallthru
          _
        %p1038 = scmp.lt.s32.totalorder %s24, 1
        %s1039 = scalar_select %p1038, %s24, 1
        %s1040 = smul.addr %s1039, 8
        %s1041 = scalar_lea.vmem %s6, %s1040
        %p1042 = scmp.lt.s32.totalorder %s24, 1
        %s1043 = scalar_select %p1042, %s24, 1
        %s1044 = smul.addr %s1043, 8
        %s1045 = scalar_lea.vmem %s7, %s1044
        // Predicated region
        $region65: #{_lambda_.2} parent=43 // pred_check
          %p1046 = pneg %p194
        $region66: #{_lambda_.2} parent=43 // pred_check_branch
          %1048 = sbr.rel (%p1046) target = $region68
        $region67: #{_lambda_.2} parent=43 // pred_region
          _
        $region68: #{_lambda_.2} parent=43 // pred_fallthru
          _
        // Predicated region
        $region69: #{_lambda_.2} parent=43 // pred_check
          %p1049 = pneg %p220
        $region70: #{_lambda_.2} parent=43 // pred_check_branch
          %1051 = sbr.rel (%p1049) target = $region72
        $region71: #{_lambda_.2} parent=43 // pred_region
          _
        $region72: #{_lambda_.2} parent=43 // pred_fallthru
          _
        // Predicated region
        $region73: #{_lambda_.2} parent=43 // pred_check
          %p1052 = pneg %p241
        $region74: #{_lambda_.2} parent=43 // pred_check_branch
          %1054 = sbr.rel (%p1052) target = $region76
        $region75: #{_lambda_.2} parent=43 // pred_region
          _
        $region76: #{_lambda_.2} parent=43 // pred_fallthru
          _
        // Predicated region
        $region77: #{_lambda_.2} parent=43 // pred_check
          %p1055 = pneg %p241
        $region78: #{_lambda_.2} parent=43 // pred_check_branch
          %1057 = sbr.rel (%p1055) target = $region80
        $region79: #{_lambda_.2} parent=43 // pred_region
          _
        $region80: #{_lambda_.2} parent=43 // pred_fallthru
          _
      $region44: #{_lambda_.2} parent=5 // pred_fallthru
        _
      %p1058 = scmp.le.s32.totalorder 2, %s19
      // Predicated region
      $region81: #{_lambda_.2} parent=5 // pred_check
        %p1059 = pneg %p1058
      $region82: #{_lambda_.2} parent=5 // pred_check_branch
        %1061 = sbr.rel (%p1059) target = $region84
      $region83: #{_lambda_.2} parent=5 // pred_region
        %s1062 = ssub.s32 %s19, 2
        // Predicated region
        $region85: #{_lambda_.2} parent=83 // pred_check
          %p1063 = pneg %p200
        $region86: #{_lambda_.2} parent=83 // pred_check_branch
          %1065 = sbr.rel (%p1063) target = $region88
        $region87: #{_lambda_.2} parent=83 // pred_region
          %p1066 = scmp.lt.s32.totalorder %s25, 1
          %s1067 = scalar_select %p1066, %s25, 1
          %s1068 = smul.addr %s1067, 8
          %s1069 = scalar_lea.vmem %s6, %s1068
        $region88: #{_lambda_.2} parent=83 // pred_fallthru
          _
        // Predicated region
        $region89: #{_lambda_.2} parent=83 // pred_check
          %p1070 = pneg %p226
        $region90: #{_lambda_.2} parent=83 // pred_check_branch
          %1072 = sbr.rel (%p1070) target = $region92
        $region91: #{_lambda_.2} parent=83 // pred_region
          %p1073 = scmp.lt.s32.totalorder %s25, 1
          %s1074 = scalar_select %p1073, %s25, 1
          %s1075 = smul.addr %s1074, 8
          %s1076 = scalar_lea.vmem %s7, %s1075
        $region92: #{_lambda_.2} parent=83 // pred_fallthru
          _
      $region84: #{_lambda_.2} parent=5 // pred_fallthru
        _
    $region6: #{_lambda_.2} parent=1 // loop_footer
      %s23 = sadd.s32 1, %s19
    $region7: #{_lambda_.2} parent=1 // loop_footer_branch
      %18 = sbr.rel target = $region3
    $region8: #{_lambda_.2} parent=1 // loop_exit
      _
    %1077 = vsyncpa [#allocation6], 1
    %s1078 = scalar_lea.sflag [#allocation6], 1
    %1079 = vsyncpa %s1078, 1
    %1080 = vsyncpa [#allocation8], 1
    %s1081 = scalar_lea.sflag [#allocation8], 1
    %1082 = vsyncpa %s1081, 1

</llo_original>
